<compile_context>
chip_gen: v7x
topology: tpu7x:2x2x1
jax: 0.10.0
libtpu: 0.0.40
codegen_flags: <defaults>
</compile_context>

<pallas_src>
import functools
from dataclasses import dataclass, field
from typing import Dict, List, Tuple

import jax
import jax.numpy as jnp
from jax import lax
from jax.experimental import pallas as pl
from jax.experimental.pallas import tpu as pltpu

_VMEM_LIMIT = 32 * 1024 * 1024        # safe scoped-VMEM budget on v5e/v6e/v7x
_SCORE_FUSE_MAX_ITEMS = 4096          # fuse scores into user tower below this


# --------------------------------------------------------------------------
# Kernel 1: fused multi-feature EmbeddingBag pooling (sum / mean)
# --------------------------------------------------------------------------

def _pooling_kernel(*refs, dims, modes, tb, batch):
    """Grid = (num_batch_tiles,).
    refs = [off_0, val_0, off_1, val_1, ...] (SMEM, scalar-prefetched),
           [table_0, ..., table_{F-1}]       (VMEM, whole arrays),
           out_ref                            (TB, sum(dims))."""
    F = len(dims)
    off_refs = refs[0:2 * F:2]
    val_refs = refs[1:2 * F:2]
    tbl_refs = refs[2 * F:3 * F]
    out_ref = refs[3 * F]
    tile = pl.program_id(0)

    def pool_feature(off_ref, val_ref, tbl_ref, d, col, is_mean):
        def body_b(lb, carry):
            # clamp so partial last tiles never read SMEM out of bounds
            b = jnp.minimum(tile * tb + lb, batch - 1)
            start = off_ref[b]
            end = off_ref[b + 1]

            def body_i(i, acc):
                row = tbl_ref[pl.ds(val_ref[i], 1), :]      # gather one row
                return acc + row.astype(jnp.float32)

            # only iterate over ids that actually exist in this bag
            acc = lax.fori_loop(start, end, body_i,
                                jnp.zeros((1, d), jnp.float32))
            if is_mean:
                # empty-bag guard: 1/max(len,1) -> zeros, matches reference
                acc = acc * (1.0 / jnp.maximum(end - start, 1).astype(jnp.float32))
            out_ref[pl.ds(lb, 1), col:col + d] = acc
            return carry

        lax.fori_loop(0, tb, body_b, 0)

    col = 0
    for f in range(F):
        pool_feature(off_refs[f], val_refs[f], tbl_refs[f],
                     dims[f], col, modes[f] == "mean")
        col += dims[f]


def pallas_multi_embedding_bag(offsets_list, values_list, tables, modes):
    """Pool every id-list feature of one tower in a single kernel.
    Returns (B, sum(embedding_dims)) fp32."""
    B = int(offsets_list[0].shape[0])
    F = len(tables)
    dims = tuple(int(t.shape[1]) for t in tables)
    total_d = sum(dims)
    TB = B if B <= 128 else 128
    grid = (pl.cdiv(B, TB),)

    scalar_args = []
    for off, val in zip(offsets_list, values_list):
        nnz = int(val.shape[0])
        off_ext = jnp.concatenate(
            [off.astype(jnp.int32), jnp.full((1,), nnz, jnp.int32)])
        val_pad = val.astype(jnp.int32) if nnz > 0 else jnp.zeros((1,), jnp.int32)
        scalar_args += [off_ext, val_pad]

    # TODO(synk): for production-sized tables that do not fit VMEM, keep them
    # in HBM (memory_space=pl.ANY) and double-buffer row gathers with
    # pltpu.make_async_copy instead of whole-array VMEM blocks.
    table_specs = [pl.BlockSpec(t.shape, lambda i, *_: (0, 0)) for t in tables]

    kernel = functools.partial(_pooling_kernel, dims=dims, modes=tuple(modes),
                               tb=TB, batch=B)
    grid_spec = pltpu.PrefetchScalarGridSpec(
        num_scalar_prefetch=2 * F,
        grid=grid,
        in_specs=table_specs,
        out_specs=pl.BlockSpec((TB, total_d), lambda i, *_: (i, 0)),
    )
    return pl.pallas_call(
        kernel,
        grid_spec=grid_spec,
        out_shape=jax.ShapeDtypeStruct((B, total_d), jnp.float32),
        compiler_params=pltpu.CompilerParams(
            dimension_semantics=("parallel",),
            vmem_limit_bytes=_VMEM_LIMIT),
    )(*scalar_args, *tables)


# --------------------------------------------------------------------------
# Kernel 2: fused tower MLP (sparse_proj -> float_proj -> overarch),
#           optionally fused with the user@item^T score matmul.
# --------------------------------------------------------------------------

def _fused_tower_kernel(*refs, n_sp, n_fl, n_ov_rest, fuse_score):
    sparse_ref, float_ref = refs[0], refs[1]
    p = 2
    sp_wb = refs[p:p + 2 * n_sp]; p += 2 * n_sp
    fl_wb = refs[p:p + 2 * n_fl]; p += 2 * n_fl
    w0s_ref, w0f_ref, b0_ref = refs[p:p + 3]; p += 3
    ov_wb = refs[p:p + 2 * n_ov_rest]; p += 2 * n_ov_rest
    item_ref = None
    if fuse_score:
        item_ref = refs[p]; p += 1
    out_ref = refs[p]

    def mlp(x, wb):
        for i in range(0, len(wb), 2):
            x = jnp.dot(x, wb[i][...], preferred_element_type=jnp.float32)
            x = jnp.maximum(x + wb[i + 1][...], 0.0)
        return x

    s = mlp(sparse_ref[...].astype(jnp.float32), sp_wb)
    f = mlp(float_ref[...].astype(jnp.float32), fl_wb)
    # First overarch layer with split weight: s@W[:sp] + f@W[sp:] + b
    # (replaces a lane-axis concat, which would be a VMEM relayout).
    x = jnp.dot(s, w0s_ref[...], preferred_element_type=jnp.float32)
    x = x + jnp.dot(f, w0f_ref[...], preferred_element_type=jnp.float32)
    x = jnp.maximum(x + b0_ref[...], 0.0)
    x = mlp(x, ov_wb)
    if fuse_score:
        # user_emb @ item_emb^T without materializing a transpose
        x = lax.dot_general(x, item_ref[...],
                            dimension_numbers=(((1,), (1,)), ((), ())),
                            preferred_element_type=jnp.float32)
    out_ref[...] = x.astype(out_ref.dtype)


def pallas_tower_mlp(sparse, flt, sparse_layers, float_layers, overarch_layers,
                     item_emb=None):
    B = sparse.shape[0]
    sp_dim = sparse_layers[-1][0].shape[1] if sparse_layers else sparse.shape[1]
    w_ov0, b_ov0 = overarch_layers[0]
    w_ov0_s, w_ov0_f = w_ov0[:sp_dim], w_ov0[sp_dim:]
    rest_ov = overarch_layers[1:]
    out_dim = overarch_layers[-1][0].shape[1]

    TB = B if B <= 256 else 256
    grid = (pl.cdiv(B, TB),)

    def whole(x):
        # TODO(synk): at production hidden sizes mark these constant-index
        # weight blocks pipeline_mode=pl.Buffered(1) to avoid double-buffering.
        return pl.BlockSpec(x.shape, lambda i: (0, 0))

    args = [sparse, flt]
    in_specs = [pl.BlockSpec((TB, sparse.shape[1]), lambda i: (i, 0)),
                pl.BlockSpec((TB, flt.shape[1]), lambda i: (i, 0))]
    for w, b in list(sparse_layers) + list(float_layers):
        args += [w, b]; in_specs += [whole(w), whole(b)]
    args += [w_ov0_s, w_ov0_f, b_ov0]
    in_specs += [whole(w_ov0_s), whole(w_ov0_f), whole(b_ov0)]
    for w, b in rest_ov:
        args += [w, b]; in_specs += [whole(w), whole(b)]

    if item_emb is not None:
        args.append(item_emb)
        in_specs.append(whole(item_emb))
        out_cols = item_emb.shape[0]
    else:
        out_cols = out_dim

    kernel = functools.partial(_fused_tower_kernel,
                               n_sp=len(sparse_layers),
                               n_fl=len(float_layers),
                               n_ov_rest=len(rest_ov),
                               fuse_score=item_emb is not None)
    return pl.pallas_call(
        kernel,
        grid=grid,
        in_specs=in_specs,
        out_specs=pl.BlockSpec((TB, out_cols), lambda i: (i, 0)),
        out_shape=jax.ShapeDtypeStruct((B, out_cols), jnp.float32),
        compiler_params=pltpu.CompilerParams(
            dimension_semantics=("parallel",),
            vmem_limit_bytes=_VMEM_LIMIT),
    )(*args)


# --------------------------------------------------------------------------
# Kernel 3: standalone tiled score matrix  user @ item^T  (large item batches)
# --------------------------------------------------------------------------

def _score_kernel(u_ref, it_ref, o_ref):
    o_ref[...] = lax.dot_general(
        u_ref[...], it_ref[...],
        dimension_numbers=(((1,), (1,)), ((), ())),
        preferred_element_type=jnp.float32).astype(o_ref.dtype)


def pallas_score(user_emb, item_emb):
    Bu, D = user_emb.shape
    Bi, _ = item_emb.shape
    TM = Bu if Bu <= 256 else 256
    TN = Bi if Bi <= 256 else 256
    return pl.pallas_call(
        _score_kernel,
        grid=(pl.cdiv(Bu, TM), pl.cdiv(Bi, TN)),
        in_specs=[pl.BlockSpec((TM, D), lambda i, j: (i, 0)),
                  pl.BlockSpec((TN, D), lambda i, j: (j, 0))],
        out_specs=pl.BlockSpec((TM, TN), lambda i, j: (i, j)),
        out_shape=jax.ShapeDtypeStruct((Bu, Bi), jnp.float32),
        compiler_params=pltpu.CompilerParams(
            dimension_semantics=("parallel", "parallel"),
            vmem_limit_bytes=_VMEM_LIMIT),
    )(user_emb, item_emb)


# --------------------------------------------------------------------------
# configs / params
# --------------------------------------------------------------------------

@dataclass
class IdListFeatureConfig:
    fid: int
    num_embeddings: int
    embedding_dim: int
    pooling_type: str = "sum"


@dataclass
class FloatFeatureConfig:
    name: str


@dataclass
class FeatureConfig:
    user_id_list_features: List[IdListFeatureConfig] = field(default_factory=list)
    user_float_features: List[FloatFeatureConfig] = field(default_factory=list)
    item_id_list_features: List[IdListFeatureConfig] = field(default_factory=list)
    item_float_features: List[FloatFeatureConfig] = field(default_factory=list)


def _init_linear(key, in_dim, out_dim):
    kw, kb = jax.random.split(key)
    lim = 1.0 / (in_dim ** 0.5)
    w_t = jax.random.uniform(kw, (in_dim, out_dim), jnp.float32, -lim, lim)
    b = jax.random.uniform(kb, (1, out_dim), jnp.float32, -lim, lim)
    return w_t, b


def _init_mlp(key, in_dim, dims):
    layers, prev = [], in_dim
    for d in dims:
        key, sub = jax.random.split(key)
        layers.append(_init_linear(sub, prev, d))
        prev = d
    return layers, prev


def init_tower_params(key, id_cfgs, n_float, sparse_dims, float_dims,
                      overarch_dims, output_dim):
    params = {"tables": {}}
    for cfg in id_cfgs:
        key, sub = jax.random.split(key)
        params["tables"][str(cfg.fid)] = jax.random.normal(
            sub, (cfg.num_embeddings, cfg.embedding_dim), jnp.float32)
    key, k1 = jax.random.split(key)
    params["sparse_proj"], sp_dim = _init_mlp(
        k1, sum(c.embedding_dim for c in id_cfgs), sparse_dims)
    key, k2 = jax.random.split(key)
    params["float_proj"], fl_dim = _init_mlp(k2, n_float, float_dims)
    key, k3 = jax.random.split(key)
    params["overarch"], _ = _init_mlp(k3, sp_dim + fl_dim,
                                      overarch_dims + [output_dim])
    return params


# --------------------------------------------------------------------------
# pure-JAX reference (for correctness check)
# --------------------------------------------------------------------------

def _ref_embedding_bag(values, offsets, table, mode):
    B, nnz = offsets.shape[0], values.shape[0]
    if nnz == 0:
        return jnp.zeros((B, table.shape[1]), table.dtype)
    idx = jnp.arange(nnz)
    seg = jnp.sum(idx[:, None] >= offsets[None, :], axis=1) - 1
    pooled = jnp.zeros((B, table.shape[1]), table.dtype).at[seg].add(table[values])
    if mode == "mean":
        nxt = jnp.concatenate([offsets[1:], jnp.array([nnz], offsets.dtype)])
        lengths = jnp.maximum(nxt - offsets, 1).astype(table.dtype)
        pooled = pooled / lengths[:, None]
    return pooled


def _ref_mlp(x, layers):
    for w, b in layers:
        x = jnp.maximum(x @ w + b, 0.0)
    return x


# --------------------------------------------------------------------------
# forward
# --------------------------------------------------------------------------

def tower_forward(params, id_cfgs,
                  id_list_features: Dict[str, Tuple[jnp.ndarray, jnp.ndarray]],
                  float_features, *, use_pallas=True, fuse_item_emb=None):
    if use_pallas:
        offs, vals, tables, modes = [], [], [], []
        for cfg in id_cfgs:
            v, o = id_list_features[str(cfg.fid)]
            vals.append(v)
            offs.append(o)
            tables.append(params["tables"][str(cfg.fid)])
            modes.append(cfg.pooling_type)
        sparse = pallas_multi_embedding_bag(offs, vals, tables, modes)
        return pallas_tower_mlp(sparse, float_features,
                                params["sparse_proj"], params["float_proj"],
                                params["overarch"], item_emb=fuse_item_emb)
    # pure-JAX reference path
    embs = []
    for cfg in id_cfgs:
        values, offsets = id_list_features[str(cfg.fid)]
        embs.append(_ref_embedding_bag(values, offsets,
                                       params["tables"][str(cfg.fid)],
                                       cfg.pooling_type))
    sparse = jnp.concatenate(embs, axis=1)
    s = _ref_mlp(sparse, params["sparse_proj"])
    f = _ref_mlp(float_features, params["float_proj"])
    return _ref_mlp(jnp.concatenate([s, f], axis=1), params["overarch"])


def two_tower_forward(user_params, item_params, fc: FeatureConfig,
                      user_ids, user_float, item_ids, item_float,
                      *, use_pallas=True):
    it = tower_forward(item_params, fc.item_id_list_features, item_ids,
                       item_float, use_pallas=use_pallas)
    if use_pallas:
        if it.shape[0] <= _SCORE_FUSE_MAX_ITEMS:
            # score fused into the user-tower kernel (item_emb as VMEM block)
            return tower_forward(user_params, fc.user_id_list_features,
                                 user_ids, user_float, use_pallas=True,
                                 fuse_item_emb=it)
        u = tower_forward(user_params, fc.user_id_list_features, user_ids,
                          user_float, use_pallas=True)
        return pallas_score(u, it)
    u = tower_forward(user_params, fc.user_id_list_features, user_ids,
                      user_float, use_pallas=False)
    return u @ it.T


# --------------------------------------------------------------------------
# demo
# --------------------------------------------------------------------------

if __name__ == "__main__":
    USER_B, ITEM_B = 8, 16       # >=8 rows so sublanes are not mostly padding
    MAX_BAG = 4                  # ragged bags, 0..4 ids each (tests empty bags)
    OUT_DIM = 8

    fc = FeatureConfig(
        user_id_list_features=[IdListFeatureConfig(0, 50, 8, "sum"),
                               IdListFeatureConfig(1, 40, 8, "mean")],
        user_float_features=[FloatFeatureConfig(f"uf{i}") for i in range(4)],
        item_id_list_features=[IdListFeatureConfig(2, 60, 8, "sum"),
                               IdListFeatureConfig(3, 30, 8, "mean")],
        item_float_features=[FloatFeatureConfig(f"if{i}") for i in range(4)],
    )

    key = jax.random.PRNGKey(0)
    key, ku, ki = jax.random.split(key, 3)
    user_params = init_tower_params(
        ku, fc.user_id_list_features, len(fc.user_float_features),
        sparse_dims=[16], float_dims=[8], overarch_dims=[16], output_dim=OUT_DIM)
    item_params = init_tower_params(
        ki, fc.item_id_list_features, len(fc.item_float_features),
        sparse_dims=[16], float_dims=[8], overarch_dims=[16], output_dim=OUT_DIM)

    def make_id_features(key, cfgs, batch):
        # host-side ragged data construction (outside the jitted forward)
        feats = {}
        for cfg in cfgs:
            key, k_len, k_val = jax.random.split(key, 3)
            lengths = jax.random.randint(k_len, (batch,), 0, MAX_BAG + 1,
                                         dtype=jnp.int32)
            nnz = int(jnp.sum(lengths))
            offsets = jnp.concatenate(
                [jnp.zeros((1,), jnp.int32),
                 jnp.cumsum(lengths)[:-1].astype(jnp.int32)])
            values = jax.random.randint(k_val, (max(nnz, 1),), 0,
                                        cfg.num_embeddings,
                                        dtype=jnp.int32)[:nnz]
            feats[str(cfg.fid)] = (values, offsets)
        return key, feats

    key, user_ids = make_id_features(key, fc.user_id_list_features, USER_B)
    key, item_ids = make_id_features(key, fc.item_id_list_features, ITEM_B)
    key, kuf, kif = jax.random.split(key, 3)
    user_float = jax.random.normal(kuf, (USER_B, len(fc.user_float_features)),
                                   jnp.float32)
    item_float = jax.random.normal(kif, (ITEM_B, len(fc.item_float_features)),
                                   jnp.float32)

    # Whole Pallas forward is jit-traceable (no host syncs inside the model).
    fwd_pallas = jax.jit(lambda up, ip, uids, uf, iids, iflt:
                         two_tower_forward(up, ip, fc, uids, uf, iids, iflt,
                                           use_pallas=True))
    out = fwd_pallas(user_params, item_params, user_ids, user_float,
                     item_ids, item_float)
    out = jax.block_until_ready(out)

    ref = two_tower_forward(user_params, item_params, fc,
                            user_ids, user_float, item_ids, item_float,
                            use_pallas=False)
    assert out.shape == (USER_B, ITEM_B)
    assert jnp.allclose(out, ref, atol=1e-4, rtol=1e-4), "mismatch vs JAX reference"

    print("KERNEL_OK")
</pallas_src>

<mosaic_0001>
module attributes {stable_mosaic.version = 11 : i64} {
  func.func @_pooling_kernel(%arg0: i32, %arg1: memref<17xi32, #tpu.memory_space<smem>>, %arg2: memref<28xi32, #tpu.memory_space<smem>>, %arg3: memref<17xi32, #tpu.memory_space<smem>>, %arg4: memref<46xi32, #tpu.memory_space<smem>>, %arg5: memref<60x8xf32, #tpu.memory_space<vmem>>, %arg6: memref<30x8xf32, #tpu.memory_space<vmem>>, %arg7: memref<16x16xf32, #tpu.memory_space<vmem>>) attributes {dimension_semantics = [#tpu.dimension_semantics<parallel>], iteration_bounds = array<i64: 1>, scalar_prefetch = 4 : i64, scratch_operands = 0 : i64, tpu.core_type = #tpu.core_type<tc>, window_params = [{pipeline_mode = #tpu.pipeline_mode<synchronous>, transform_indices = @transform_0, window_bounds = array<i64: 60, 8>}, {pipeline_mode = #tpu.pipeline_mode<synchronous>, transform_indices = @transform_1, window_bounds = array<i64: 30, 8>}, {transform_indices = @transform_2, window_bounds = array<i64: 16, 16>}]} {
    %c0_i32 = arith.constant 0 : i32
    %c16_i32 = arith.constant 16 : i32
    %0 = arith.addi %c0_i32, %c16_i32 : i32
    %c1_i32 = arith.constant 1 : i32
    scf.for %arg8 = %c0_i32 to %0 step %c1_i32  : i32 {
      %c16_i32_5 = arith.constant 16 : i32
      %2 = arith.muli %arg0, %c16_i32_5 : i32
      %3 = arith.addi %2, %arg8 : i32
      %c15_i32 = arith.constant 15 : i32
      %4 = arith.minsi %3, %c15_i32 : i32
      %5 = arith.index_cast %4 : i32 to index
      %6 = memref.load %arg1[%5] : memref<17xi32, #tpu.memory_space<smem>>
      %c1_i32_6 = arith.constant 1 : i32
      %7 = arith.addi %4, %c1_i32_6 : i32
      %8 = arith.index_cast %7 : i32 to index
      %9 = memref.load %arg1[%8] : memref<17xi32, #tpu.memory_space<smem>>
      %cst = arith.constant 0.000000e+00 : f32
      %10 = vector.broadcast %cst : f32 to vector<1x8xf32>
      %11 = arith.subi %9, %6 : i32
      %12 = arith.addi %6, %11 : i32
      %c1_i32_7 = arith.constant 1 : i32
      %13 = scf.for %arg9 = %6 to %12 step %c1_i32_7 iter_args(%arg10 = %10) -> (vector<1x8xf32>)  : i32 {
        %16 = arith.index_cast %arg9 : i32 to index
        %17 = memref.load %arg2[%16] : memref<28xi32, #tpu.memory_space<smem>>
        %18 = arith.index_cast %17 : i32 to index
        %c0_8 = arith.constant 0 : index
        %19 = vector.load %arg5[%18, %c0_8] : memref<60x8xf32, #tpu.memory_space<vmem>>, vector<1x8xf32>
        %20 = arith.addf %arg10, %19 : vector<1x8xf32>
        scf.yield %20 : vector<1x8xf32>
      }
      %14 = arith.index_cast %arg8 : i32 to index
      %c0 = arith.constant 0 : index
      %15 = vector.load %arg7[%14, %c0] : memref<16x16xf32, #tpu.memory_space<vmem>>, vector<1x8xf32>
      tpu.vector_store %arg7[%14, %c0], %13 {strides = array<i32>} : memref<16x16xf32, #tpu.memory_space<vmem>>, vector<1x8xf32>,
    }
    %c16_i32_0 = arith.constant 16 : i32
    %c0_i32_1 = arith.constant 0 : i32
    %c16_i32_2 = arith.constant 16 : i32
    %1 = arith.addi %c0_i32_1, %c16_i32_2 : i32
    %c1_i32_3 = arith.constant 1 : i32
    scf.for %arg8 = %c0_i32_1 to %1 step %c1_i32_3  : i32 {
      %c16_i32_5 = arith.constant 16 : i32
      %2 = arith.muli %arg0, %c16_i32_5 : i32
      %3 = arith.addi %2, %arg8 : i32
      %c15_i32 = arith.constant 15 : i32
      %4 = arith.minsi %3, %c15_i32 : i32
      %5 = arith.index_cast %4 : i32 to index
      %6 = memref.load %arg3[%5] : memref<17xi32, #tpu.memory_space<smem>>
      %c1_i32_6 = arith.constant 1 : i32
      %7 = arith.addi %4, %c1_i32_6 : i32
      %8 = arith.index_cast %7 : i32 to index
      %9 = memref.load %arg3[%8] : memref<17xi32, #tpu.memory_space<smem>>
      %cst = arith.constant 0.000000e+00 : f32
      %10 = vector.broadcast %cst : f32 to vector<1x8xf32>
      %11 = arith.subi %9, %6 : i32
      %12 = arith.addi %6, %11 : i32
      %c1_i32_7 = arith.constant 1 : i32
      %13 = scf.for %arg9 = %6 to %12 step %c1_i32_7 iter_args(%arg10 = %10) -> (vector<1x8xf32>)  : i32 {
        %22 = arith.index_cast %arg9 : i32 to index
        %23 = memref.load %arg4[%22] : memref<46xi32, #tpu.memory_space<smem>>
        %24 = arith.index_cast %23 : i32 to index
        %c0 = arith.constant 0 : index
        %25 = vector.load %arg6[%24, %c0] : memref<30x8xf32, #tpu.memory_space<vmem>>, vector<1x8xf32>
        %26 = arith.addf %arg10, %25 : vector<1x8xf32>
        scf.yield %26 : vector<1x8xf32>
      }
      %14 = arith.subi %9, %6 : i32
      %c1_i32_8 = arith.constant 1 : i32
      %15 = arith.maxsi %14, %c1_i32_8 : i32
      %16 = arith.sitofp %15 : i32 to f32
      %cst_9 = arith.constant 1.000000e+00 : f32
      %17 = arith.divf %cst_9, %16 : f32
      %18 = vector.broadcast %17 : f32 to vector<1x8xf32>
      %19 = arith.mulf %13, %18 : vector<1x8xf32>
      %20 = arith.index_cast %arg8 : i32 to index
      %c8 = arith.constant 8 : index
      %21 = vector.load %arg7[%20, %c8] : memref<16x16xf32, #tpu.memory_space<vmem>>, vector<1x8xf32>
      tpu.vector_store %arg7[%20, %c8], %19 {strides = array<i32>} : memref<16x16xf32, #tpu.memory_space<vmem>>, vector<1x8xf32>,
    }
    %c16_i32_4 = arith.constant 16 : i32
    return
  }
  func.func @transform_0(%arg0: i32, %arg1: memref<17xi32, #tpu.memory_space<smem>>, %arg2: memref<28xi32, #tpu.memory_space<smem>>, %arg3: memref<17xi32, #tpu.memory_space<smem>>, %arg4: memref<46xi32, #tpu.memory_space<smem>>) -> (i32, i32) {
    %c0_i32 = arith.constant 0 : i32
    %c0_i32_0 = arith.constant 0 : i32
    %c0_i32_1 = arith.constant 0 : i32
    return %c0_i32, %c0_i32_0 : i32, i32
  }
  func.func @transform_1(%arg0: i32, %arg1: memref<17xi32, #tpu.memory_space<smem>>, %arg2: memref<28xi32, #tpu.memory_space<smem>>, %arg3: memref<17xi32, #tpu.memory_space<smem>>, %arg4: memref<46xi32, #tpu.memory_space<smem>>) -> (i32, i32) {
    %c0_i32 = arith.constant 0 : i32
    %c0_i32_0 = arith.constant 0 : i32
    %c0_i32_1 = arith.constant 0 : i32
    return %c0_i32, %c0_i32_0 : i32, i32
  }
  func.func @transform_2(%arg0: i32, %arg1: memref<17xi32, #tpu.memory_space<smem>>, %arg2: memref<28xi32, #tpu.memory_space<smem>>, %arg3: memref<17xi32, #tpu.memory_space<smem>>, %arg4: memref<46xi32, #tpu.memory_space<smem>>) -> (i32, i32) {
    %c0_i32 = arith.constant 0 : i32
    %c0_i32_0 = arith.constant 0 : i32
    return %arg0, %c0_i32 : i32, i32
  }
}

module attributes {stable_mosaic.version = 11 : i64} {
  func.func @_fused_tower_kernel(%arg0: i32, %arg1: memref<16x16xf32, #tpu.memory_space<vmem>>, %arg2: memref<16x4xf32, #tpu.memory_space<vmem>>, %arg3: memref<16x16xf32, #tpu.memory_space<vmem>>, %arg4: memref<1x16xf32, #tpu.memory_space<vmem>>, %arg5: memref<4x8xf32, #tpu.memory_space<vmem>>, %arg6: memref<1x8xf32, #tpu.memory_space<vmem>>, %arg7: memref<16x16xf32, #tpu.memory_space<vmem>>, %arg8: memref<8x16xf32, #tpu.memory_space<vmem>>, %arg9: memref<1x16xf32, #tpu.memory_space<vmem>>, %arg10: memref<16x8xf32, #tpu.memory_space<vmem>>, %arg11: memref<1x8xf32, #tpu.memory_space<vmem>>, %arg12: memref<16x8xf32, #tpu.memory_space<vmem>>) attributes {dimension_semantics = [#tpu.dimension_semantics<parallel>], iteration_bounds = array<i64: 1>, scalar_prefetch = 0 : i64, scratch_operands = 0 : i64, tpu.core_type = #tpu.core_type<tc>, window_params = [{transform_indices = @transform_0, window_bounds = array<i64: 16, 16>}, {transform_indices = @transform_1, window_bounds = array<i64: 16, 4>}, {pipeline_mode = #tpu.pipeline_mode<synchronous>, transform_indices = @transform_2, window_bounds = array<i64: 16, 16>}, {pipeline_mode = #tpu.pipeline_mode<synchronous>, transform_indices = @transform_3, window_bounds = array<i64: 1, 16>}, {pipeline_mode = #tpu.pipeline_mode<synchronous>, transform_indices = @transform_4, window_bounds = array<i64: 4, 8>}, {pipeline_mode = #tpu.pipeline_mode<synchronous>, transform_indices = @transform_5, window_bounds = array<i64: 1, 8>}, {pipeline_mode = #tpu.pipeline_mode<synchronous>, transform_indices = @transform_6, window_bounds = array<i64: 16, 16>}, {pipeline_mode = #tpu.pipeline_mode<synchronous>, transform_indices = @transform_7, window_bounds = array<i64: 8, 16>}, {pipeline_mode = #tpu.pipeline_mode<synchronous>, transform_indices = @transform_8, window_bounds = array<i64: 1, 16>}, {pipeline_mode = #tpu.pipeline_mode<synchronous>, transform_indices = @transform_9, window_bounds = array<i64: 16, 8>}, {pipeline_mode = #tpu.pipeline_mode<synchronous>, transform_indices = @transform_10, window_bounds = array<i64: 1, 8>}, {transform_indices = @transform_11, window_bounds = array<i64: 16, 8>}]} {
    %c0 = arith.constant 0 : index
    %c0_0 = arith.constant 0 : index
    %0 = vector.load %arg1[%c0, %c0_0] : memref<16x16xf32, #tpu.memory_space<vmem>>, vector<16x16xf32>
    %c0_1 = arith.constant 0 : index
    %c0_2 = arith.constant 0 : index
    %1 = vector.load %arg3[%c0_1, %c0_2] : memref<16x16xf32, #tpu.memory_space<vmem>>, vector<16x16xf32>
    %cst = arith.constant dense<0.000000e+00> : vector<16x16xf32>
    %2 = tpu.matmul %0, %1, %cst {dimension_numbers = #tpu.dot_dimension_numbers<[1], [0], [0], [1], [0, 0, 1, 1], [], []>} : vector<16x16xf32>, vector<16x16xf32>, vector<16x16xf32> -> vector<16x16xf32>
    %c0_3 = arith.constant 0 : index
    %c0_4 = arith.constant 0 : index
    %3 = vector.load %arg4[%c0_3, %c0_4] : memref<1x16xf32, #tpu.memory_space<vmem>>, vector<1x16xf32>
    %4 = vector.broadcast %3 : vector<1x16xf32> to vector<16x16xf32>
    %5 = arith.addf %2, %4 : vector<16x16xf32>
    %cst_5 = arith.constant 0.000000e+00 : f32
    %6 = vector.broadcast %cst_5 : f32 to vector<16x16xf32>
    %7 = arith.maximumf %5, %6 : vector<16x16xf32>
    %c0_6 = arith.constant 0 : index
    %c0_7 = arith.constant 0 : index
    %8 = vector.load %arg2[%c0_6, %c0_7] : memref<16x4xf32, #tpu.memory_space<vmem>>, vector<16x4xf32>
    %c0_8 = arith.constant 0 : index
    %c0_9 = arith.constant 0 : index
    %9 = vector.load %arg5[%c0_8, %c0_9] : memref<4x8xf32, #tpu.memory_space<vmem>>, vector<4x8xf32>
    %cst_10 = arith.constant dense<0.000000e+00> : vector<16x8xf32>
    %10 = tpu.matmul %8, %9, %cst_10 {dimension_numbers = #tpu.dot_dimension_numbers<[1], [0], [0], [1], [0, 0, 1, 1], [], []>} : vector<16x4xf32>, vector<4x8xf32>, vector<16x8xf32> -> vector<16x8xf32>
    %c0_11 = arith.constant 0 : index
    %c0_12 = arith.constant 0 : index
    %11 = vector.load %arg6[%c0_11, %c0_12] : memref<1x8xf32, #tpu.memory_space<vmem>>, vector<1x8xf32>
    %12 = vector.broadcast %11 : vector<1x8xf32> to vector<16x8xf32>
    %13 = arith.addf %10, %12 : vector<16x8xf32>
    %cst_13 = arith.constant 0.000000e+00 : f32
    %14 = vector.broadcast %cst_13 : f32 to vector<16x8xf32>
    %15 = arith.maximumf %13, %14 : vector<16x8xf32>
    %c0_14 = arith.constant 0 : index
    %c0_15 = arith.constant 0 : index
    %16 = vector.load %arg7[%c0_14, %c0_15] : memref<16x16xf32, #tpu.memory_space<vmem>>, vector<16x16xf32>
    %cst_16 = arith.constant dense<0.000000e+00> : vector<16x16xf32>
    %17 = tpu.matmul %7, %16, %cst_16 {dimension_numbers = #tpu.dot_dimension_numbers<[1], [0], [0], [1], [0, 0, 1, 1], [], []>} : vector<16x16xf32>, vector<16x16xf32>, vector<16x16xf32> -> vector<16x16xf32>
    %c0_17 = arith.constant 0 : index
    %c0_18 = arith.constant 0 : index
    %18 = vector.load %arg8[%c0_17, %c0_18] : memref<8x16xf32, #tpu.memory_space<vmem>>, vector<8x16xf32>
    %cst_19 = arith.constant dense<0.000000e+00> : vector<16x16xf32>
    %19 = tpu.matmul %15, %18, %cst_19 {dimension_numbers = #tpu.dot_dimension_numbers<[1], [0], [0], [1], [0, 0, 1, 1], [], []>} : vector<16x8xf32>, vector<8x16xf32>, vector<16x16xf32> -> vector<16x16xf32>
    %20 = arith.addf %17, %19 : vector<16x16xf32>
    %c0_20 = arith.constant 0 : index
    %c0_21 = arith.constant 0 : index
    %21 = vector.load %arg9[%c0_20, %c0_21] : memref<1x16xf32, #tpu.memory_space<vmem>>, vector<1x16xf32>
    %22 = vector.broadcast %21 : vector<1x16xf32> to vector<16x16xf32>
    %23 = arith.addf %20, %22 : vector<16x16xf32>
    %cst_22 = arith.constant 0.000000e+00 : f32
    %24 = vector.broadcast %cst_22 : f32 to vector<16x16xf32>
    %25 = arith.maximumf %23, %24 : vector<16x16xf32>
    %c0_23 = arith.constant 0 : index
    %c0_24 = arith.constant 0 : index
    %26 = vector.load %arg10[%c0_23, %c0_24] : memref<16x8xf32, #tpu.memory_space<vmem>>, vector<16x8xf32>
    %cst_25 = arith.constant dense<0.000000e+00> : vector<16x8xf32>
    %27 = tpu.matmul %25, %26, %cst_25 {dimension_numbers = #tpu.dot_dimension_numbers<[1], [0], [0], [1], [0, 0, 1, 1], [], []>} : vector<16x16xf32>, vector<16x8xf32>, vector<16x8xf32> -> vector<16x8xf32>
    %c0_26 = arith.constant 0 : index
    %c0_27 = arith.constant 0 : index
    %28 = vector.load %arg11[%c0_26, %c0_27] : memref<1x8xf32, #tpu.memory_space<vmem>>, vector<1x8xf32>
    %29 = vector.broadcast %28 : vector<1x8xf32> to vector<16x8xf32>
    %30 = arith.addf %27, %29 : vector<16x8xf32>
    %cst_28 = arith.constant 0.000000e+00 : f32
    %31 = vector.broadcast %cst_28 : f32 to vector<16x8xf32>
    %32 = arith.maximumf %30, %31 : vector<16x8xf32>
    %c0_29 = arith.constant 0 : index
    %c0_30 = arith.constant 0 : index
    %33 = vector.load %arg12[%c0_29, %c0_30] : memref<16x8xf32, #tpu.memory_space<vmem>>, vector<16x8xf32>
    tpu.vector_store %arg12[%c0_29, %c0_30], %32 {strides = array<i32>} : memref<16x8xf32, #tpu.memory_space<vmem>>, vector<16x8xf32>,
    return
  }
  func.func @transform_0(%arg0: i32) -> (i32, i32) {
    %c0_i32 = arith.constant 0 : i32
    %c0_i32_0 = arith.constant 0 : i32
    return %arg0, %c0_i32 : i32, i32
  }
  func.func @transform_1(%arg0: i32) -> (i32, i32) {
    %c0_i32 = arith.constant 0 : i32
    %c0_i32_0 = arith.constant 0 : i32
    return %arg0, %c0_i32 : i32, i32
  }
  func.func @transform_2(%arg0: i32) -> (i32, i32) {
    %c0_i32 = arith.constant 0 : i32
    %c0_i32_0 = arith.constant 0 : i32
    %c0_i32_1 = arith.constant 0 : i32
    return %c0_i32, %c0_i32_0 : i32, i32
  }
  func.func @transform_3(%arg0: i32) -> (i32, i32) {
    %c0_i32 = arith.constant 0 : i32
    %c0_i32_0 = arith.constant 0 : i32
    %c0_i32_1 = arith.constant 0 : i32
    return %c0_i32, %c0_i32_0 : i32, i32
  }
  func.func @transform_4(%arg0: i32) -> (i32, i32) {
    %c0_i32 = arith.constant 0 : i32
    %c0_i32_0 = arith.constant 0 : i32
    %c0_i32_1 = arith.constant 0 : i32
    return %c0_i32, %c0_i32_0 : i32, i32
  }
  func.func @transform_5(%arg0: i32) -> (i32, i32) {
    %c0_i32 = arith.constant 0 : i32
    %c0_i32_0 = arith.constant 0 : i32
    %c0_i32_1 = arith.constant 0 : i32
    return %c0_i32, %c0_i32_0 : i32, i32
  }
  func.func @transform_6(%arg0: i32) -> (i32, i32) {
    %c0_i32 = arith.constant 0 : i32
    %c0_i32_0 = arith.constant 0 : i32
    %c0_i32_1 = arith.constant 0 : i32
    return %c0_i32, %c0_i32_0 : i32, i32
  }
  func.func @transform_7(%arg0: i32) -> (i32, i32) {
    %c0_i32 = arith.constant 0 : i32
    %c0_i32_0 = arith.constant 0 : i32
    %c0_i32_1 = arith.constant 0 : i32
    return %c0_i32, %c0_i32_0 : i32, i32
  }
  func.func @transform_8(%arg0: i32) -> (i32, i32) {
    %c0_i32 = arith.constant 0 : i32
    %c0_i32_0 = arith.constant 0 : i32
    %c0_i32_1 = arith.constant 0 : i32
    return %c0_i32, %c0_i32_0 : i32, i32
  }
  func.func @transform_9(%arg0: i32) -> (i32, i32) {
    %c0_i32 = arith.constant 0 : i32
    %c0_i32_0 = arith.constant 0 : i32
    %c0_i32_1 = arith.constant 0 : i32
    return %c0_i32, %c0_i32_0 : i32, i32
  }
  func.func @transform_10(%arg0: i32) -> (i32, i32) {
    %c0_i32 = arith.constant 0 : i32
    %c0_i32_0 = arith.constant 0 : i32
    %c0_i32_1 = arith.constant 0 : i32
    return %c0_i32, %c0_i32_0 : i32, i32
  }
  func.func @transform_11(%arg0: i32) -> (i32, i32) {
    %c0_i32 = arith.constant 0 : i32
    %c0_i32_0 = arith.constant 0 : i32
    return %arg0, %c0_i32 : i32, i32
  }
}

module attributes {stable_mosaic.version = 11 : i64} {
  func.func @_pooling_kernel(%arg0: i32, %arg1: memref<9xi32, #tpu.memory_space<smem>>, %arg2: memref<23xi32, #tpu.memory_space<smem>>, %arg3: memref<9xi32, #tpu.memory_space<smem>>, %arg4: memref<19xi32, #tpu.memory_space<smem>>, %arg5: memref<50x8xf32, #tpu.memory_space<vmem>>, %arg6: memref<40x8xf32, #tpu.memory_space<vmem>>, %arg7: memref<8x16xf32, #tpu.memory_space<vmem>>) attributes {dimension_semantics = [#tpu.dimension_semantics<parallel>], iteration_bounds = array<i64: 1>, scalar_prefetch = 4 : i64, scratch_operands = 0 : i64, tpu.core_type = #tpu.core_type<tc>, window_params = [{pipeline_mode = #tpu.pipeline_mode<synchronous>, transform_indices = @transform_0, window_bounds = array<i64: 50, 8>}, {pipeline_mode = #tpu.pipeline_mode<synchronous>, transform_indices = @transform_1, window_bounds = array<i64: 40, 8>}, {transform_indices = @transform_2, window_bounds = array<i64: 8, 16>}]} {
    %c0_i32 = arith.constant 0 : i32
    %c8_i32 = arith.constant 8 : i32
    %0 = arith.addi %c0_i32, %c8_i32 : i32
    %c1_i32 = arith.constant 1 : i32
    scf.for %arg8 = %c0_i32 to %0 step %c1_i32  : i32 {
      %c8_i32_5 = arith.constant 8 : i32
      %2 = arith.muli %arg0, %c8_i32_5 : i32
      %3 = arith.addi %2, %arg8 : i32
      %c7_i32 = arith.constant 7 : i32
      %4 = arith.minsi %3, %c7_i32 : i32
      %5 = arith.index_cast %4 : i32 to index
      %6 = memref.load %arg1[%5] : memref<9xi32, #tpu.memory_space<smem>>
      %c1_i32_6 = arith.constant 1 : i32
      %7 = arith.addi %4, %c1_i32_6 : i32
      %8 = arith.index_cast %7 : i32 to index
      %9 = memref.load %arg1[%8] : memref<9xi32, #tpu.memory_space<smem>>
      %cst = arith.constant 0.000000e+00 : f32
      %10 = vector.broadcast %cst : f32 to vector<1x8xf32>
      %11 = arith.subi %9, %6 : i32
      %12 = arith.addi %6, %11 : i32
      %c1_i32_7 = arith.constant 1 : i32
      %13 = scf.for %arg9 = %6 to %12 step %c1_i32_7 iter_args(%arg10 = %10) -> (vector<1x8xf32>)  : i32 {
        %16 = arith.index_cast %arg9 : i32 to index
        %17 = memref.load %arg2[%16] : memref<23xi32, #tpu.memory_space<smem>>
        %18 = arith.index_cast %17 : i32 to index
        %c0_8 = arith.constant 0 : index
        %19 = vector.load %arg5[%18, %c0_8] : memref<50x8xf32, #tpu.memory_space<vmem>>, vector<1x8xf32>
        %20 = arith.addf %arg10, %19 : vector<1x8xf32>
        scf.yield %20 : vector<1x8xf32>
      }
      %14 = arith.index_cast %arg8 : i32 to index
      %c0 = arith.constant 0 : index
      %15 = vector.load %arg7[%14, %c0] : memref<8x16xf32, #tpu.memory_space<vmem>>, vector<1x8xf32>
      tpu.vector_store %arg7[%14, %c0], %13 {strides = array<i32>} : memref<8x16xf32, #tpu.memory_space<vmem>>, vector<1x8xf32>,
    }
    %c8_i32_0 = arith.constant 8 : i32
    %c0_i32_1 = arith.constant 0 : i32
    %c8_i32_2 = arith.constant 8 : i32
    %1 = arith.addi %c0_i32_1, %c8_i32_2 : i32
    %c1_i32_3 = arith.constant 1 : i32
    scf.for %arg8 = %c0_i32_1 to %1 step %c1_i32_3  : i32 {
      %c8_i32_5 = arith.constant 8 : i32
      %2 = arith.muli %arg0, %c8_i32_5 : i32
      %3 = arith.addi %2, %arg8 : i32
      %c7_i32 = arith.constant 7 : i32
      %4 = arith.minsi %3, %c7_i32 : i32
      %5 = arith.index_cast %4 : i32 to index
      %6 = memref.load %arg3[%5] : memref<9xi32, #tpu.memory_space<smem>>
      %c1_i32_6 = arith.constant 1 : i32
      %7 = arith.addi %4, %c1_i32_6 : i32
      %8 = arith.index_cast %7 : i32 to index
      %9 = memref.load %arg3[%8] : memref<9xi32, #tpu.memory_space<smem>>
      %cst = arith.constant 0.000000e+00 : f32
      %10 = vector.broadcast %cst : f32 to vector<1x8xf32>
      %11 = arith.subi %9, %6 : i32
      %12 = arith.addi %6, %11 : i32
      %c1_i32_7 = arith.constant 1 : i32
      %13 = scf.for %arg9 = %6 to %12 step %c1_i32_7 iter_args(%arg10 = %10) -> (vector<1x8xf32>)  : i32 {
        %22 = arith.index_cast %arg9 : i32 to index
        %23 = memref.load %arg4[%22] : memref<19xi32, #tpu.memory_space<smem>>
        %24 = arith.index_cast %23 : i32 to index
        %c0 = arith.constant 0 : index
        %25 = vector.load %arg6[%24, %c0] : memref<40x8xf32, #tpu.memory_space<vmem>>, vector<1x8xf32>
        %26 = arith.addf %arg10, %25 : vector<1x8xf32>
        scf.yield %26 : vector<1x8xf32>
      }
      %14 = arith.subi %9, %6 : i32
      %c1_i32_8 = arith.constant 1 : i32
      %15 = arith.maxsi %14, %c1_i32_8 : i32
      %16 = arith.sitofp %15 : i32 to f32
      %cst_9 = arith.constant 1.000000e+00 : f32
      %17 = arith.divf %cst_9, %16 : f32
      %18 = vector.broadcast %17 : f32 to vector<1x8xf32>
      %19 = arith.mulf %13, %18 : vector<1x8xf32>
      %20 = arith.index_cast %arg8 : i32 to index
      %c8 = arith.constant 8 : index
      %21 = vector.load %arg7[%20, %c8] : memref<8x16xf32, #tpu.memory_space<vmem>>, vector<1x8xf32>
      tpu.vector_store %arg7[%20, %c8], %19 {strides = array<i32>} : memref<8x16xf32, #tpu.memory_space<vmem>>, vector<1x8xf32>,
    }
    %c8_i32_4 = arith.constant 8 : i32
    return
  }
  func.func @transform_0(%arg0: i32, %arg1: memref<9xi32, #tpu.memory_space<smem>>, %arg2: memref<23xi32, #tpu.memory_space<smem>>, %arg3: memref<9xi32, #tpu.memory_space<smem>>, %arg4: memref<19xi32, #tpu.memory_space<smem>>) -> (i32, i32) {
    %c0_i32 = arith.constant 0 : i32
    %c0_i32_0 = arith.constant 0 : i32
    %c0_i32_1 = arith.constant 0 : i32
    return %c0_i32, %c0_i32_0 : i32, i32
  }
  func.func @transform_1(%arg0: i32, %arg1: memref<9xi32, #tpu.memory_space<smem>>, %arg2: memref<23xi32, #tpu.memory_space<smem>>, %arg3: memref<9xi32, #tpu.memory_space<smem>>, %arg4: memref<19xi32, #tpu.memory_space<smem>>) -> (i32, i32) {
    %c0_i32 = arith.constant 0 : i32
    %c0_i32_0 = arith.constant 0 : i32
    %c0_i32_1 = arith.constant 0 : i32
    return %c0_i32, %c0_i32_0 : i32, i32
  }
  func.func @transform_2(%arg0: i32, %arg1: memref<9xi32, #tpu.memory_space<smem>>, %arg2: memref<23xi32, #tpu.memory_space<smem>>, %arg3: memref<9xi32, #tpu.memory_space<smem>>, %arg4: memref<19xi32, #tpu.memory_space<smem>>) -> (i32, i32) {
    %c0_i32 = arith.constant 0 : i32
    %c0_i32_0 = arith.constant 0 : i32
    return %arg0, %c0_i32 : i32, i32
  }
}

module attributes {stable_mosaic.version = 11 : i64} {
  func.func @_fused_tower_kernel(%arg0: i32, %arg1: memref<8x16xf32, #tpu.memory_space<vmem>>, %arg2: memref<8x4xf32, #tpu.memory_space<vmem>>, %arg3: memref<16x16xf32, #tpu.memory_space<vmem>>, %arg4: memref<1x16xf32, #tpu.memory_space<vmem>>, %arg5: memref<4x8xf32, #tpu.memory_space<vmem>>, %arg6: memref<1x8xf32, #tpu.memory_space<vmem>>, %arg7: memref<16x16xf32, #tpu.memory_space<vmem>>, %arg8: memref<8x16xf32, #tpu.memory_space<vmem>>, %arg9: memref<1x16xf32, #tpu.memory_space<vmem>>, %arg10: memref<16x8xf32, #tpu.memory_space<vmem>>, %arg11: memref<1x8xf32, #tpu.memory_space<vmem>>, %arg12: memref<16x8xf32, #tpu.memory_space<vmem>>, %arg13: memref<8x16xf32, #tpu.memory_space<vmem>>) attributes {dimension_semantics = [#tpu.dimension_semantics<parallel>], iteration_bounds = array<i64: 1>, scalar_prefetch = 0 : i64, scratch_operands = 0 : i64, tpu.core_type = #tpu.core_type<tc>, window_params = [{transform_indices = @transform_0, window_bounds = array<i64: 8, 16>}, {transform_indices = @transform_1, window_bounds = array<i64: 8, 4>}, {pipeline_mode = #tpu.pipeline_mode<synchronous>, transform_indices = @transform_2, window_bounds = array<i64: 16, 16>}, {pipeline_mode = #tpu.pipeline_mode<synchronous>, transform_indices = @transform_3, window_bounds = array<i64: 1, 16>}, {pipeline_mode = #tpu.pipeline_mode<synchronous>, transform_indices = @transform_4, window_bounds = array<i64: 4, 8>}, {pipeline_mode = #tpu.pipeline_mode<synchronous>, transform_indices = @transform_5, window_bounds = array<i64: 1, 8>}, {pipeline_mode = #tpu.pipeline_mode<synchronous>, transform_indices = @transform_6, window_bounds = array<i64: 16, 16>}, {pipeline_mode = #tpu.pipeline_mode<synchronous>, transform_indices = @transform_7, window_bounds = array<i64: 8, 16>}, {pipeline_mode = #tpu.pipeline_mode<synchronous>, transform_indices = @transform_8, window_bounds = array<i64: 1, 16>}, {pipeline_mode = #tpu.pipeline_mode<synchronous>, transform_indices = @transform_9, window_bounds = array<i64: 16, 8>}, {pipeline_mode = #tpu.pipeline_mode<synchronous>, transform_indices = @transform_10, window_bounds = array<i64: 1, 8>}, {pipeline_mode = #tpu.pipeline_mode<synchronous>, transform_indices = @transform_11, window_bounds = array<i64: 16, 8>}, {transform_indices = @transform_12, window_bounds = array<i64: 8, 16>}]} {
    %c0 = arith.constant 0 : index
    %c0_0 = arith.constant 0 : index
    %0 = vector.load %arg1[%c0, %c0_0] : memref<8x16xf32, #tpu.memory_space<vmem>>, vector<8x16xf32>
    %c0_1 = arith.constant 0 : index
    %c0_2 = arith.constant 0 : index
    %1 = vector.load %arg3[%c0_1, %c0_2] : memref<16x16xf32, #tpu.memory_space<vmem>>, vector<16x16xf32>
    %cst = arith.constant dense<0.000000e+00> : vector<8x16xf32>
    %2 = tpu.matmul %0, %1, %cst {dimension_numbers = #tpu.dot_dimension_numbers<[1], [0], [0], [1], [0, 0, 1, 1], [], []>} : vector<8x16xf32>, vector<16x16xf32>, vector<8x16xf32> -> vector<8x16xf32>
    %c0_3 = arith.constant 0 : index
    %c0_4 = arith.constant 0 : index
    %3 = vector.load %arg4[%c0_3, %c0_4] : memref<1x16xf32, #tpu.memory_space<vmem>>, vector<1x16xf32>
    %4 = vector.broadcast %3 : vector<1x16xf32> to vector<8x16xf32>
    %5 = arith.addf %2, %4 : vector<8x16xf32>
    %cst_5 = arith.constant 0.000000e+00 : f32
    %6 = vector.broadcast %cst_5 : f32 to vector<8x16xf32>
    %7 = arith.maximumf %5, %6 : vector<8x16xf32>
    %c0_6 = arith.constant 0 : index
    %c0_7 = arith.constant 0 : index
    %8 = vector.load %arg2[%c0_6, %c0_7] : memref<8x4xf32, #tpu.memory_space<vmem>>, vector<8x4xf32>
    %c0_8 = arith.constant 0 : index
    %c0_9 = arith.constant 0 : index
    %9 = vector.load %arg5[%c0_8, %c0_9] : memref<4x8xf32, #tpu.memory_space<vmem>>, vector<4x8xf32>
    %cst_10 = arith.constant dense<0.000000e+00> : vector<8x8xf32>
    %10 = tpu.matmul %8, %9, %cst_10 {dimension_numbers = #tpu.dot_dimension_numbers<[1], [0], [0], [1], [0, 0, 1, 1], [], []>} : vector<8x4xf32>, vector<4x8xf32>, vector<8x8xf32> -> vector<8x8xf32>
    %c0_11 = arith.constant 0 : index
    %c0_12 = arith.constant 0 : index
    %11 = vector.load %arg6[%c0_11, %c0_12] : memref<1x8xf32, #tpu.memory_space<vmem>>, vector<1x8xf32>
    %12 = vector.broadcast %11 : vector<1x8xf32> to vector<8x8xf32>
    %13 = arith.addf %10, %12 : vector<8x8xf32>
    %cst_13 = arith.constant 0.000000e+00 : f32
    %14 = vector.broadcast %cst_13 : f32 to vector<8x8xf32>
    %15 = arith.maximumf %13, %14 : vector<8x8xf32>
    %c0_14 = arith.constant 0 : index
    %c0_15 = arith.constant 0 : index
    %16 = vector.load %arg7[%c0_14, %c0_15] : memref<16x16xf32, #tpu.memory_space<vmem>>, vector<16x16xf32>
    %cst_16 = arith.constant dense<0.000000e+00> : vector<8x16xf32>
    %17 = tpu.matmul %7, %16, %cst_16 {dimension_numbers = #tpu.dot_dimension_numbers<[1], [0], [0], [1], [0, 0, 1, 1], [], []>} : vector<8x16xf32>, vector<16x16xf32>, vector<8x16xf32> -> vector<8x16xf32>
    %c0_17 = arith.constant 0 : index
    %c0_18 = arith.constant 0 : index
    %18 = vector.load %arg8[%c0_17, %c0_18] : memref<8x16xf32, #tpu.memory_space<vmem>>, vector<8x16xf32>
    %cst_19 = arith.constant dense<0.000000e+00> : vector<8x16xf32>
    %19 = tpu.matmul %15, %18, %cst_19 {dimension_numbers = #tpu.dot_dimension_numbers<[1], [0], [0], [1], [0, 0, 1, 1], [], []>} : vector<8x8xf32>, vector<8x16xf32>, vector<8x16xf32> -> vector<8x16xf32>
    %20 = arith.addf %17, %19 : vector<8x16xf32>
    %c0_20 = arith.constant 0 : index
    %c0_21 = arith.constant 0 : index
    %21 = vector.load %arg9[%c0_20, %c0_21] : memref<1x16xf32, #tpu.memory_space<vmem>>, vector<1x16xf32>
    %22 = vector.broadcast %21 : vector<1x16xf32> to vector<8x16xf32>
    %23 = arith.addf %20, %22 : vector<8x16xf32>
    %cst_22 = arith.constant 0.000000e+00 : f32
    %24 = vector.broadcast %cst_22 : f32 to vector<8x16xf32>
    %25 = arith.maximumf %23, %24 : vector<8x16xf32>
    %c0_23 = arith.constant 0 : index
    %c0_24 = arith.constant 0 : index
    %26 = vector.load %arg10[%c0_23, %c0_24] : memref<16x8xf32, #tpu.memory_space<vmem>>, vector<16x8xf32>
    %cst_25 = arith.constant dense<0.000000e+00> : vector<8x8xf32>
    %27 = tpu.matmul %25, %26, %cst_25 {dimension_numbers = #tpu.dot_dimension_numbers<[1], [0], [0], [1], [0, 0, 1, 1], [], []>} : vector<8x16xf32>, vector<16x8xf32>, vector<8x8xf32> -> vector<8x8xf32>
    %c0_26 = arith.constant 0 : index
    %c0_27 = arith.constant 0 : index
    %28 = vector.load %arg11[%c0_26, %c0_27] : memref<1x8xf32, #tpu.memory_space<vmem>>, vector<1x8xf32>
    %29 = vector.broadcast %28 : vector<1x8xf32> to vector<8x8xf32>
    %30 = arith.addf %27, %29 : vector<8x8xf32>
    %cst_28 = arith.constant 0.000000e+00 : f32
    %31 = vector.broadcast %cst_28 : f32 to vector<8x8xf32>
    %32 = arith.maximumf %30, %31 : vector<8x8xf32>
    %c0_29 = arith.constant 0 : index
    %c0_30 = arith.constant 0 : index
    %33 = vector.load %arg12[%c0_29, %c0_30] : memref<16x8xf32, #tpu.memory_space<vmem>>, vector<16x8xf32>
    %cst_31 = arith.constant dense<0.000000e+00> : vector<8x16xf32>
    %34 = tpu.matmul %32, %33, %cst_31 {dimension_numbers = #tpu.dot_dimension_numbers<[1], [1], [0], [0], [0, 0, 1, 0], [], []>} : vector<8x8xf32>, vector<16x8xf32>, vector<8x16xf32> -> vector<8x16xf32>
    %c0_32 = arith.constant 0 : index
    %c0_33 = arith.constant 0 : index
    %35 = vector.load %arg13[%c0_32, %c0_33] : memref<8x16xf32, #tpu.memory_space<vmem>>, vector<8x16xf32>
    tpu.vector_store %arg13[%c0_32, %c0_33], %34 {strides = array<i32>} : memref<8x16xf32, #tpu.memory_space<vmem>>, vector<8x16xf32>,
    return
  }
  func.func @transform_0(%arg0: i32) -> (i32, i32) {
    %c0_i32 = arith.constant 0 : i32
    %c0_i32_0 = arith.constant 0 : i32
    return %arg0, %c0_i32 : i32, i32
  }
  func.func @transform_1(%arg0: i32) -> (i32, i32) {
    %c0_i32 = arith.constant 0 : i32
    %c0_i32_0 = arith.constant 0 : i32
    return %arg0, %c0_i32 : i32, i32
  }
  func.func @transform_2(%arg0: i32) -> (i32, i32) {
    %c0_i32 = arith.constant 0 : i32
    %c0_i32_0 = arith.constant 0 : i32
    %c0_i32_1 = arith.constant 0 : i32
    return %c0_i32, %c0_i32_0 : i32, i32
  }
  func.func @transform_3(%arg0: i32) -> (i32, i32) {
    %c0_i32 = arith.constant 0 : i32
    %c0_i32_0 = arith.constant 0 : i32
    %c0_i32_1 = arith.constant 0 : i32
    return %c0_i32, %c0_i32_0 : i32, i32
  }
  func.func @transform_4(%arg0: i32) -> (i32, i32) {
    %c0_i32 = arith.constant 0 : i32
    %c0_i32_0 = arith.constant 0 : i32
    %c0_i32_1 = arith.constant 0 : i32
    return %c0_i32, %c0_i32_0 : i32, i32
  }
  func.func @transform_5(%arg0: i32) -> (i32, i32) {
    %c0_i32 = arith.constant 0 : i32
    %c0_i32_0 = arith.constant 0 : i32
    %c0_i32_1 = arith.constant 0 : i32
    return %c0_i32, %c0_i32_0 : i32, i32
  }
  func.func @transform_6(%arg0: i32) -> (i32, i32) {
    %c0_i32 = arith.constant 0 : i32
    %c0_i32_0 = arith.constant 0 : i32
    %c0_i32_1 = arith.constant 0 : i32
    return %c0_i32, %c0_i32_0 : i32, i32
  }
  func.func @transform_7(%arg0: i32) -> (i32, i32) {
    %c0_i32 = arith.constant 0 : i32
    %c0_i32_0 = arith.constant 0 : i32
    %c0_i32_1 = arith.constant 0 : i32
    return %c0_i32, %c0_i32_0 : i32, i32
  }
  func.func @transform_8(%arg0: i32) -> (i32, i32) {
    %c0_i32 = arith.constant 0 : i32
    %c0_i32_0 = arith.constant 0 : i32
    %c0_i32_1 = arith.constant 0 : i32
    return %c0_i32, %c0_i32_0 : i32, i32
  }
  func.func @transform_9(%arg0: i32) -> (i32, i32) {
    %c0_i32 = arith.constant 0 : i32
    %c0_i32_0 = arith.constant 0 : i32
    %c0_i32_1 = arith.constant 0 : i32
    return %c0_i32, %c0_i32_0 : i32, i32
  }
  func.func @transform_10(%arg0: i32) -> (i32, i32) {
    %c0_i32 = arith.constant 0 : i32
    %c0_i32_0 = arith.constant 0 : i32
    %c0_i32_1 = arith.constant 0 : i32
    return %c0_i32, %c0_i32_0 : i32, i32
  }
  func.func @transform_11(%arg0: i32) -> (i32, i32) {
    %c0_i32 = arith.constant 0 : i32
    %c0_i32_0 = arith.constant 0 : i32
    %c0_i32_1 = arith.constant 0 : i32
    return %c0_i32, %c0_i32_0 : i32, i32
  }
  func.func @transform_12(%arg0: i32) -> (i32, i32) {
    %c0_i32 = arith.constant 0 : i32
    %c0_i32_0 = arith.constant 0 : i32
    return %arg0, %c0_i32 : i32, i32
  }
}

</mosaic_0001>

<llo_original>
// kernel: _lambda_.4
$region0: #{_lambda_.4}
  #allocation0 [shape = 'u32[]', space=smem, size = 0x4, offset = 0x4, fixed_abs, tag = 'smem constant byte address 0x4 - core index']
  #allocation1 [shape = 'u32[144,128]{1,0:T(1,128)}', space=vmem, size = 0x12000, scoped, tag = 'internal scratch']
  #allocation2 [shape = 's32[1]{0}', space=sflag, size = 0x4, scoped, tag = 'scoped memory for _lambda_.4']
  #allocation3 [shape = 'u8[512]{0}', space=smem, size = 0x200, scoped, tag = 'prefetched SMEM operand 0']
  #allocation4 [shape = 'u8[512]{0}', space=smem, size = 0x200, scoped, tag = 'prefetched SMEM operand 1']
  #allocation5 [shape = 'u8[512]{0}', space=smem, size = 0x200, scoped, tag = 'prefetched SMEM operand 2']
  #allocation6 [shape = 'u8[512]{0}', space=smem, size = 0x200, scoped, tag = 'prefetched SMEM operand 3']
  %s0 = inlined_call_operand.vmem [shape: s32[17], index: 0, kind: input, shape index: {}]
  %s1 = inlined_call_operand.vmem [shape: s32[28], index: 1, kind: input, shape index: {}]
  %s2 = inlined_call_operand.vmem [shape: s32[17], index: 2, kind: input, shape index: {}]
  %s3 = inlined_call_operand.vmem [shape: s32[46], index: 3, kind: input, shape index: {}]
  %s4 = inlined_call_operand.vmem [shape: f32[60,8], index: 4, kind: input, shape index: {}]
  %s5 = inlined_call_operand.vmem [shape: f32[30,8], index: 5, kind: input, shape index: {}]
  %s6 = inlined_call_operand.vmem [shape: f32[16,16], index: 6, kind: output, shape index: {}]
  %s7 = sld [smem:[#allocation0]]
  $region46: #{_lambda_.4} parent=0
    _
  %s9 = ssub.s32 1, %s7
  %s10 = scalar_select 0, %s9, %s7
  %s11 = sshll.u32 %s0, 4
  %s12 = int_to_ptr.vmem [resolvable:$true] %s11
  %14 = dma.vmem_to_smem %s12, 16, [#allocation3], [#allocation2]
  %s15 = sshll.u32 %s1, 4
  %s16 = int_to_ptr.vmem [resolvable:$true] %s15
  %18 = dma.vmem_to_smem %s16, 16, [#allocation4], [#allocation2]
  %s19 = sshll.u32 %s2, 4
  %s20 = int_to_ptr.vmem [resolvable:$true] %s19
  %22 = dma.vmem_to_smem %s20, 16, [#allocation5], [#allocation2]
  %s23 = sshll.u32 %s3, 4
  %s24 = int_to_ptr.vmem [resolvable:$true] %s23
  %26 = dma.vmem_to_smem %s24, 16, [#allocation6], [#allocation2]
  %27 = dma.done [#allocation2], 64
  %28 = sfence
  // Predicated region
  $region2: #{_lambda_.4} parent=0 // pred_check
    _
  $region3: #{_lambda_.4} parent=0 // pred_check_branch
    %30 = sbr.rel (0) target = $region5
  $region4: #{_lambda_.4} parent=0 // pred_region
    _
  $region5: #{_lambda_.4} parent=0 // pred_fallthru
    _
  // Predicated region
  $region6: #{_lambda_.4} parent=0 // pred_check
    _
  $region7: #{_lambda_.4} parent=0 // pred_check_branch
    %32 = sbr.rel (0) target = $region9
  $region8: #{_lambda_.4} parent=0 // pred_region
    _
  $region9: #{_lambda_.4} parent=0 // pred_fallthru
    _
  loop: start=0, step=1, limit=16
  $region10: #{_lambda_.4} parent=0 // loop_pre_header
    _
  $region11: #{_lambda_.4} parent=0 // loop_header
    %s34 = sphi 0, %s38
    %p35 = scmp.ge.s32.totalorder %s34, 16
  $region12: #{_lambda_.4} parent=0 // loop_header_branch
    %37 = sbr.rel (%p35) target = $region16
  $region13: #{_lambda_.4} parent=0 // loop_body
    %s39 = smul.u32 0, 16
    %s40 = sadd.s32 %s39, %s34
    %p41 = scmp.lt.s32.totalorder %s40, 15
    %s42 = scalar_select %p41, %s40, 15
    %s43 = sld [smem:[#allocation3 + %s42]]
    %s44 = sadd.s32 %s42, 1
    %s45 = sld [smem:[#allocation3 + %s44]]
    // While loop
    $region17: #{_lambda_.4} parent=13 // loop_pre_header
      _
    $region18: #{_lambda_.4} parent=13 // loop_header
      %s47 = sphi %s43, %s49
      %p48 = scmp.ge.s32.totalorder %s47, %s45
      %v52 = vphi 0.0, %v56
    $region19: #{_lambda_.4} parent=13 // loop_header_branch
      %51 = sbr.rel (%p48) target = $region23
    $region20: #{_lambda_.4} parent=13 // loop_body
      %s53 = sld [smem:[#allocation4 + %s47]]
      %s54 = scalar_lea.vmem %s4, %s53
      %v55 = vld [vmem:[%s54] sm:$0x1]
      %v56 = vadd.f32 %v52, %v55
    $region21: #{_lambda_.4} parent=13 // loop_footer
      %s49 = sadd.s32 %s47, 1
    $region22: #{_lambda_.4} parent=13 // loop_footer_branch
      %46 = sbr.rel target = $region18
    $region23: #{_lambda_.4} parent=13 // loop_exit
      _
    %s57 = scalar_lea.vmem %s6, %s34
    %vm58 = vcmask 57344
    %59 = vst.msk [vmem:[%s57] sm:$0x1] %vm58, %v52
  $region14: #{_lambda_.4} parent=0 // loop_footer
    %s38 = sadd.s32 1, %s34
  $region15: #{_lambda_.4} parent=0 // loop_footer_branch
    %33 = sbr.rel target = $region11
  $region16: #{_lambda_.4} parent=0 // loop_exit
    _
  loop: start=0, step=1, limit=16
  $region24: #{_lambda_.4} parent=0 // loop_pre_header
    _
  $region25: #{_lambda_.4} parent=0 // loop_header
    %s61 = sphi 0, %s65
    %p62 = scmp.ge.s32.totalorder %s61, 16
  $region26: #{_lambda_.4} parent=0 // loop_header_branch
    %64 = sbr.rel (%p62) target = $region30
  $region27: #{_lambda_.4} parent=0 // loop_body
    %s66 = smul.u32 0, 16
    %s67 = sadd.s32 %s66, %s61
    %p68 = scmp.lt.s32.totalorder %s67, 15
    %s69 = scalar_select %p68, %s67, 15
    %s70 = sld [smem:[#allocation5 + %s69]]
    %s71 = sadd.s32 %s69, 1
    %s72 = sld [smem:[#allocation5 + %s71]]
    // While loop
    $region31: #{_lambda_.4} parent=27 // loop_pre_header
      _
    $region32: #{_lambda_.4} parent=27 // loop_header
      %s74 = sphi %s70, %s76
      %p75 = scmp.ge.s32.totalorder %s74, %s72
      %v79 = vphi 0.0, %v83
    $region33: #{_lambda_.4} parent=27 // loop_header_branch
      %78 = sbr.rel (%p75) target = $region37
    $region34: #{_lambda_.4} parent=27 // loop_body
      %s80 = sld [smem:[#allocation6 + %s74]]
      %s81 = scalar_lea.vmem %s5, %s80
      %v82 = vld [vmem:[%s81] sm:$0x1]
      %v83 = vadd.f32 %v79, %v82
    $region35: #{_lambda_.4} parent=27 // loop_footer
      %s76 = sadd.s32 %s74, 1
    $region36: #{_lambda_.4} parent=27 // loop_footer_branch
      %73 = sbr.rel target = $region32
    $region37: #{_lambda_.4} parent=27 // loop_exit
      _
    %s84 = ssub.s32 %s72, %s70
    %p85 = scmp.gt.s32.totalorder %s84, 1
    %s86 = scalar_select %p85, %s84, 1
    %s87 = scvt.s32.f32 %s86
    %v88 = vstv %s87
    %v89 = vrcp.pop %v88
    %s90 = vtos %v89
    %v91 = vstv %s90
    %v92 = vmul.f32 %v79, %v91
    %94 = vrot.lane.b32.xlu0 %v92, 8
    %v95 = vpop.permute.xlu0 %94
    %s97 = scalar_lea.vmem %s6, %s61
    %vm98 = vcmask 122944
    %99 = vst.msk [vmem:[%s97] sm:$0x1] %vm98, %v95
  $region28: #{_lambda_.4} parent=0 // loop_footer
    %s65 = sadd.s32 1, %s61
  $region29: #{_lambda_.4} parent=0 // loop_footer_branch
    %60 = sbr.rel target = $region25
  $region30: #{_lambda_.4} parent=0 // loop_exit
    _
  // Predicated region
  $region38: #{_lambda_.4} parent=0 // pred_check
    _
  $region39: #{_lambda_.4} parent=0 // pred_check_branch
    %101 = sbr.rel (0) target = $region41
  $region40: #{_lambda_.4} parent=0 // pred_region
    _
  $region41: #{_lambda_.4} parent=0 // pred_fallthru
    _
  // Predicated region
  $region42: #{_lambda_.4} parent=0 // pred_check
    _
  $region43: #{_lambda_.4} parent=0 // pred_check_branch
    %103 = sbr.rel (0) target = $region45
  $region44: #{_lambda_.4} parent=0 // pred_region
    _
  $region45: #{_lambda_.4} parent=0 // pred_fallthru
    _

// kernel: _lambda_.6
$region0: #{_lambda_.6}
  #allocation0 [shape = 'u32[]', space=smem, size = 0x4, offset = 0x4, fixed_abs, tag = 'smem constant byte address 0x4 - core index']
  #allocation1 [shape = 'u32[144,128]{1,0:T(1,128)}', space=vmem, size = 0x12000, scoped, tag = 'internal scratch']
  #allocation2 [shape = 's32[1]{0}', space=sflag, size = 0x4, scoped, tag = 'scoped memory for _lambda_.6']
  #allocation3 [shape = 'u8[512]{0}', space=smem, size = 0x200, scoped, tag = 'prefetched SMEM operand 0']
  #allocation4 [shape = 'u8[512]{0}', space=smem, size = 0x200, scoped, tag = 'prefetched SMEM operand 1']
  #allocation5 [shape = 'u8[512]{0}', space=smem, size = 0x200, scoped, tag = 'prefetched SMEM operand 2']
  #allocation6 [shape = 'u8[512]{0}', space=smem, size = 0x200, scoped, tag = 'prefetched SMEM operand 3']
  %s0 = inlined_call_operand.vmem [shape: s32[9], index: 0, kind: input, shape index: {}]
  %s1 = inlined_call_operand.vmem [shape: s32[23], index: 1, kind: input, shape index: {}]
  %s2 = inlined_call_operand.vmem [shape: s32[9], index: 2, kind: input, shape index: {}]
  %s3 = inlined_call_operand.vmem [shape: s32[19], index: 3, kind: input, shape index: {}]
  %s4 = inlined_call_operand.vmem [shape: f32[50,8], index: 4, kind: input, shape index: {}]
  %s5 = inlined_call_operand.vmem [shape: f32[40,8], index: 5, kind: input, shape index: {}]
  %s6 = inlined_call_operand.vmem [shape: f32[8,16], index: 6, kind: output, shape index: {}]
  %s7 = sld [smem:[#allocation0]]
  $region46: #{_lambda_.6} parent=0
    _
  %s9 = ssub.s32 1, %s7
  %s10 = scalar_select 0, %s9, %s7
  %s11 = sshll.u32 %s0, 4
  %s12 = int_to_ptr.vmem [resolvable:$true] %s11
  %14 = dma.vmem_to_smem %s12, 16, [#allocation3], [#allocation2]
  %s15 = sshll.u32 %s1, 4
  %s16 = int_to_ptr.vmem [resolvable:$true] %s15
  %18 = dma.vmem_to_smem %s16, 16, [#allocation4], [#allocation2]
  %s19 = sshll.u32 %s2, 4
  %s20 = int_to_ptr.vmem [resolvable:$true] %s19
  %22 = dma.vmem_to_smem %s20, 16, [#allocation5], [#allocation2]
  %s23 = sshll.u32 %s3, 4
  %s24 = int_to_ptr.vmem [resolvable:$true] %s23
  %26 = dma.vmem_to_smem %s24, 16, [#allocation6], [#allocation2]
  %27 = dma.done [#allocation2], 64
  %28 = sfence
  // Predicated region
  $region2: #{_lambda_.6} parent=0 // pred_check
    _
  $region3: #{_lambda_.6} parent=0 // pred_check_branch
    %30 = sbr.rel (0) target = $region5
  $region4: #{_lambda_.6} parent=0 // pred_region
    _
  $region5: #{_lambda_.6} parent=0 // pred_fallthru
    _
  // Predicated region
  $region6: #{_lambda_.6} parent=0 // pred_check
    _
  $region7: #{_lambda_.6} parent=0 // pred_check_branch
    %32 = sbr.rel (0) target = $region9
  $region8: #{_lambda_.6} parent=0 // pred_region
    _
  $region9: #{_lambda_.6} parent=0 // pred_fallthru
    _
  loop: start=0, step=1, limit=8
  $region10: #{_lambda_.6} parent=0 // loop_pre_header
    _
  $region11: #{_lambda_.6} parent=0 // loop_header
    %s34 = sphi 0, %s38
    %p35 = scmp.ge.s32.totalorder %s34, 8
  $region12: #{_lambda_.6} parent=0 // loop_header_branch
    %37 = sbr.rel (%p35) target = $region16
  $region13: #{_lambda_.6} parent=0 // loop_body
    %s39 = smul.u32 0, 8
    %s40 = sadd.s32 %s39, %s34
    %p41 = scmp.lt.s32.totalorder %s40, 7
    %s42 = scalar_select %p41, %s40, 7
    %s43 = sld [smem:[#allocation3 + %s42]]
    %s44 = sadd.s32 %s42, 1
    %s45 = sld [smem:[#allocation3 + %s44]]
    // While loop
    $region17: #{_lambda_.6} parent=13 // loop_pre_header
      _
    $region18: #{_lambda_.6} parent=13 // loop_header
      %s47 = sphi %s43, %s49
      %p48 = scmp.ge.s32.totalorder %s47, %s45
      %v52 = vphi 0.0, %v56
    $region19: #{_lambda_.6} parent=13 // loop_header_branch
      %51 = sbr.rel (%p48) target = $region23
    $region20: #{_lambda_.6} parent=13 // loop_body
      %s53 = sld [smem:[#allocation4 + %s47]]
      %s54 = scalar_lea.vmem %s4, %s53
      %v55 = vld [vmem:[%s54] sm:$0x1]
      %v56 = vadd.f32 %v52, %v55
    $region21: #{_lambda_.6} parent=13 // loop_footer
      %s49 = sadd.s32 %s47, 1
    $region22: #{_lambda_.6} parent=13 // loop_footer_branch
      %46 = sbr.rel target = $region18
    $region23: #{_lambda_.6} parent=13 // loop_exit
      _
    %s57 = scalar_lea.vmem %s6, %s34
    %vm58 = vcmask 57344
    %59 = vst.msk [vmem:[%s57] sm:$0x1] %vm58, %v52
  $region14: #{_lambda_.6} parent=0 // loop_footer
    %s38 = sadd.s32 1, %s34
  $region15: #{_lambda_.6} parent=0 // loop_footer_branch
    %33 = sbr.rel target = $region11
  $region16: #{_lambda_.6} parent=0 // loop_exit
    _
  loop: start=0, step=1, limit=8
  $region24: #{_lambda_.6} parent=0 // loop_pre_header
    _
  $region25: #{_lambda_.6} parent=0 // loop_header
    %s61 = sphi 0, %s65
    %p62 = scmp.ge.s32.totalorder %s61, 8
  $region26: #{_lambda_.6} parent=0 // loop_header_branch
    %64 = sbr.rel (%p62) target = $region30
  $region27: #{_lambda_.6} parent=0 // loop_body
    %s66 = smul.u32 0, 8
    %s67 = sadd.s32 %s66, %s61
    %p68 = scmp.lt.s32.totalorder %s67, 7
    %s69 = scalar_select %p68, %s67, 7
    %s70 = sld [smem:[#allocation5 + %s69]]
    %s71 = sadd.s32 %s69, 1
    %s72 = sld [smem:[#allocation5 + %s71]]
    // While loop
    $region31: #{_lambda_.6} parent=27 // loop_pre_header
      _
    $region32: #{_lambda_.6} parent=27 // loop_header
      %s74 = sphi %s70, %s76
      %p75 = scmp.ge.s32.totalorder %s74, %s72
      %v79 = vphi 0.0, %v83
    $region33: #{_lambda_.6} parent=27 // loop_header_branch
      %78 = sbr.rel (%p75) target = $region37
    $region34: #{_lambda_.6} parent=27 // loop_body
      %s80 = sld [smem:[#allocation6 + %s74]]
      %s81 = scalar_lea.vmem %s5, %s80
      %v82 = vld [vmem:[%s81] sm:$0x1]
      %v83 = vadd.f32 %v79, %v82
    $region35: #{_lambda_.6} parent=27 // loop_footer
      %s76 = sadd.s32 %s74, 1
    $region36: #{_lambda_.6} parent=27 // loop_footer_branch
      %73 = sbr.rel target = $region32
    $region37: #{_lambda_.6} parent=27 // loop_exit
      _
    %s84 = ssub.s32 %s72, %s70
    %p85 = scmp.gt.s32.totalorder %s84, 1
    %s86 = scalar_select %p85, %s84, 1
    %s87 = scvt.s32.f32 %s86
    %v88 = vstv %s87
    %v89 = vrcp.pop %v88
    %s90 = vtos %v89
    %v91 = vstv %s90
    %v92 = vmul.f32 %v79, %v91
    %94 = vrot.lane.b32.xlu0 %v92, 8
    %v95 = vpop.permute.xlu0 %94
    %s97 = scalar_lea.vmem %s6, %s61
    %vm98 = vcmask 122944
    %99 = vst.msk [vmem:[%s97] sm:$0x1] %vm98, %v95
  $region28: #{_lambda_.6} parent=0 // loop_footer
    %s65 = sadd.s32 1, %s61
  $region29: #{_lambda_.6} parent=0 // loop_footer_branch
    %60 = sbr.rel target = $region25
  $region30: #{_lambda_.6} parent=0 // loop_exit
    _
  // Predicated region
  $region38: #{_lambda_.6} parent=0 // pred_check
    _
  $region39: #{_lambda_.6} parent=0 // pred_check_branch
    %101 = sbr.rel (0) target = $region41
  $region40: #{_lambda_.6} parent=0 // pred_region
    _
  $region41: #{_lambda_.6} parent=0 // pred_fallthru
    _
  // Predicated region
  $region42: #{_lambda_.6} parent=0 // pred_check
    _
  $region43: #{_lambda_.6} parent=0 // pred_check_branch
    %103 = sbr.rel (0) target = $region45
  $region44: #{_lambda_.6} parent=0 // pred_region
    _
  $region45: #{_lambda_.6} parent=0 // pred_fallthru
    _

// kernel: _lambda_.5
$region0: #{_lambda_.5}
  #allocation0 [shape = 'u32[]', space=smem, size = 0x4, offset = 0x4, fixed_abs, tag = 'smem constant byte address 0x4 - core index']
  #allocation1 [shape = 'u32[144,128]{1,0:T(1,128)}', space=vmem, size = 0x12000, scoped, tag = 'internal scratch']
  %s0 = inlined_call_operand.vmem [shape: f32[16,16], index: 0, kind: input, shape index: {}]
  %s1 = inlined_call_operand.vmem [shape: f32[16,4], index: 1, kind: input, shape index: {}]
  %s2 = inlined_call_operand.vmem [shape: f32[16,16], index: 2, kind: input, shape index: {}]
  %s3 = inlined_call_operand.vmem [shape: f32[1,16], index: 3, kind: input, shape index: {}]
  %s4 = inlined_call_operand.vmem [shape: f32[4,8], index: 4, kind: input, shape index: {}]
  %s5 = inlined_call_operand.vmem [shape: f32[1,8], index: 5, kind: input, shape index: {}]
  %s6 = inlined_call_operand.vmem [shape: f32[16,16], index: 6, kind: input, shape index: {}]
  %s7 = inlined_call_operand.vmem [shape: f32[8,16], index: 7, kind: input, shape index: {}]
  %s8 = inlined_call_operand.vmem [shape: f32[1,16], index: 8, kind: input, shape index: {}]
  %s9 = inlined_call_operand.vmem [shape: f32[16,8], index: 9, kind: input, shape index: {}]
  %s10 = inlined_call_operand.vmem [shape: f32[1,8], index: 10, kind: input, shape index: {}]
  %s11 = inlined_call_operand.vmem [shape: f32[16,8], index: 11, kind: output, shape index: {}]
  %s12 = sld [smem:[#allocation0]]
  $region54: #{_lambda_.5} parent=0
    _
  %s14 = ssub.s32 1, %s12
  %s15 = scalar_select 0, %s14, %s12
  // Predicated region
  $region2: #{_lambda_.5} parent=0 // pred_check
    _
  $region3: #{_lambda_.5} parent=0 // pred_check_branch
    %17 = sbr.rel (0) target = $region5
  $region4: #{_lambda_.5} parent=0 // pred_region
    _
  $region5: #{_lambda_.5} parent=0 // pred_fallthru
    _
  // Predicated region
  $region6: #{_lambda_.5} parent=0 // pred_check
    _
  $region7: #{_lambda_.5} parent=0 // pred_check_branch
    %19 = sbr.rel (0) target = $region9
  $region8: #{_lambda_.5} parent=0 // pred_region
    _
  $region9: #{_lambda_.5} parent=0 // pred_fallthru
    _
  // Predicated region
  $region10: #{_lambda_.5} parent=0 // pred_check
    _
  $region11: #{_lambda_.5} parent=0 // pred_check_branch
    %21 = sbr.rel (0) target = $region13
  $region12: #{_lambda_.5} parent=0 // pred_region
    _
  $region13: #{_lambda_.5} parent=0 // pred_fallthru
    _
  // Predicated region
  $region14: #{_lambda_.5} parent=0 // pred_check
    _
  $region15: #{_lambda_.5} parent=0 // pred_check_branch
    %23 = sbr.rel (0) target = $region17
  $region16: #{_lambda_.5} parent=0 // pred_region
    _
  $region17: #{_lambda_.5} parent=0 // pred_fallthru
    _
  // Predicated region
  $region18: #{_lambda_.5} parent=0 // pred_check
    _
  $region19: #{_lambda_.5} parent=0 // pred_check_branch
    %25 = sbr.rel (0) target = $region21
  $region20: #{_lambda_.5} parent=0 // pred_region
    _
  $region21: #{_lambda_.5} parent=0 // pred_fallthru
    _
  // Predicated region
  $region22: #{_lambda_.5} parent=0 // pred_check
    _
  $region23: #{_lambda_.5} parent=0 // pred_check_branch
    %27 = sbr.rel (0) target = $region25
  $region24: #{_lambda_.5} parent=0 // pred_region
    _
  $region25: #{_lambda_.5} parent=0 // pred_fallthru
    _
  // Predicated region
  $region26: #{_lambda_.5} parent=0 // pred_check
    _
  $region27: #{_lambda_.5} parent=0 // pred_check_branch
    %29 = sbr.rel (0) target = $region29
  $region28: #{_lambda_.5} parent=0 // pred_region
    _
  $region29: #{_lambda_.5} parent=0 // pred_fallthru
    _
  // Predicated region
  $region30: #{_lambda_.5} parent=0 // pred_check
    _
  $region31: #{_lambda_.5} parent=0 // pred_check_branch
    %31 = sbr.rel (0) target = $region33
  $region32: #{_lambda_.5} parent=0 // pred_region
    _
  $region33: #{_lambda_.5} parent=0 // pred_fallthru
    _
  // Predicated region
  $region34: #{_lambda_.5} parent=0 // pred_check
    _
  $region35: #{_lambda_.5} parent=0 // pred_check_branch
    %33 = sbr.rel (0) target = $region37
  $region36: #{_lambda_.5} parent=0 // pred_region
    _
  $region37: #{_lambda_.5} parent=0 // pred_fallthru
    _
  // Predicated region
  $region38: #{_lambda_.5} parent=0 // pred_check
    _
  $region39: #{_lambda_.5} parent=0 // pred_check_branch
    %35 = sbr.rel (0) target = $region41
  $region40: #{_lambda_.5} parent=0 // pred_region
    _
  $region41: #{_lambda_.5} parent=0 // pred_fallthru
    _
  // Predicated region
  $region42: #{_lambda_.5} parent=0 // pred_check
    _
  $region43: #{_lambda_.5} parent=0 // pred_check_branch
    %37 = sbr.rel (0) target = $region45
  $region44: #{_lambda_.5} parent=0 // pred_region
    _
  $region45: #{_lambda_.5} parent=0 // pred_fallthru
    _
  %v38 = vld [vmem:[%s0] sm:$0xff]
  %v39 = vld [vmem:[%s0 + $0x8] sm:$0xff]
  %v40 = vld [vmem:[%s2] sm:$0xff]
  %v41 = vld [vmem:[%s2 + $0x8] sm:$0xff]
  %v42 = vld [vmem:[%s3] sm:$0x1]
  %v44 = vlaneseq
  %v45 = vshrl.u32 %v44, 7
  %v46 = vsub.s32 0, %v45
  %v47 = vrot.slane %v42, %v46
  %vm49 = vcmask 130048
  %v51 = vsel %vm49, %v38, 0
  %v54 = vsel %vm49, %v39, 0
  %56 = vmatprep.subr.mxu0 0.0
  %57 = vmatpush1.msra.mxu0 %v40
  %58 = vmatprep.subr.mxu0 0.0
  %59 = vmatpush1.msra.mxu0 %v41
  %60 = vmatprep.subr.mxu0 0.0
  %61 = vmatpush1.msra.mxu0 0.0
  %62 = vmatprep.subr.mxu0 0.0
  %63 = vmatpush1.msra.mxu0 0.0
  %64 = vmatprep.subr.mxu0 0.0
  %65 = vmatpush1.msra.mxu0 0.0
  %66 = vmatprep.subr.mxu0 0.0
  %67 = vmatpush1.msra.mxu0 0.0
  %68 = vmatprep.subr.mxu0 0.0
  %69 = vmatpush1.msra.mxu0 0.0
  %70 = vmatprep.subr.mxu0 0.0
  %71 = vmatpush1.msra.mxu0 0.0
  %72 = vmatprep.subr.mxu0 0.0
  %73 = vmatpush1.msra.mxu0 0.0
  %74 = vmatprep.subr.mxu0 0.0
  %75 = vmatpush1.msra.mxu0 0.0
  %76 = vmatprep.subr.mxu0 0.0
  %77 = vmatpush1.msra.mxu0 0.0
  %78 = vmatprep.subr.mxu0 0.0
  %79 = vmatpush1.msra.mxu0 0.0
  %80 = vmatprep.subr.mxu0 0.0
  %81 = vmatpush1.msra.mxu0 0.0
  %82 = vmatprep.subr.mxu0 0.0
  %83 = vmatpush1.msra.mxu0 0.0
  %84 = vmatprep.subr.mxu0 0.0
  %85 = vmatpush1.msra.mxu0 0.0
  %86 = vmatprep.subr.mxu0 0.0
  %87 = vmatpush1.msra.mxu0 0.0
  %88 = vmatprep.subr.mxu0 0.0
  %89 = vmatpush1.msra.mxu0 0.0
  %90 = vmatprep.subr.mxu0 0.0
  %91 = vmatpush1.msra.mxu0 0.0
  %92 = vmatprep.subr.mxu0 0.0
  %93 = vmatpush1.msra.mxu0 0.0
  %94 = vmatprep.subr.mxu0 0.0
  %95 = vmatpush1.msra.mxu0 0.0
  %96 = vmatprep.subr.mxu0 0.0
  %97 = vmatpush1.msra.mxu0 0.0
  %98 = vmatprep.subr.mxu0 0.0
  %99 = vmatpush1.msra.mxu0 0.0
  %100 = vmatprep.subr.mxu0 0.0
  %101 = vmatpush1.msra.mxu0 0.0
  %102 = vmatprep.subr.mxu0 0.0
  %103 = vmatpush1.msra.mxu0 0.0
  %104 = vmatprep.subr.mxu0 0.0
  %105 = vmatpush1.msra.mxu0 0.0
  %106 = vmatprep.subr.mxu0 0.0
  %107 = vmatpush1.msra.mxu0 0.0
  %108 = vmatprep.subr.mxu0 0.0
  %109 = vmatpush1.msra.mxu0 0.0
  %110 = vmatprep.subr.mxu0 0.0
  %111 = vmatpush1.msra.mxu0 0.0
  %112 = vmatprep.subr.mxu0 0.0
  %113 = vmatpush1.msra.mxu0 0.0
  %114 = vmatprep.subr.mxu0 0.0
  %115 = vmatpush1.msra.mxu0 0.0
  %116 = vmatprep.subr.mxu0 0.0
  %117 = vmatpush1.msra.mxu0 0.0
  %118 = vmatprep.subr.mxu0 0.0
  %119 = vmatpush1.msra.mxu0 0.0
  %120 = vmatprep.mubr.f32.mxu0 0.0
  %121 = vmatmul.mubr.f32.gmra.mrb[0].mxu0 %v51
  %v122 = vpop.f32.mrb[0].mxu0
  %v123 = vadd.f32 %v47, %v122
  %v124 = vpop.f32.mrb[0].mxu0
  %125 = vmatprep.mubr.f32.mxu0 0.0
  %126 = vmatmul.mubr.f32.gmra.mrb[0].mxu0 %v54
  %v127 = vpop.f32.mrb[0].mxu0
  %v128 = vadd.f32 %v47, %v127
  %v129 = vpop.f32.mrb[0].mxu0
  %130 = vdwg.mxu0
  %v131 = vmax.f32 %v123, 0.0
  %v132 = vmax.f32 %v128, 0.0
  %v133 = vld [vmem:[%s1] sm:$0xff]
  %v134 = vld [vmem:[%s1 + $0x8] sm:$0xff]
  %v135 = vld [vmem:[%s4] sm:$0xf]
  %v136 = vld [vmem:[%s5] sm:$0x1]
  %v138 = vlaneseq
  %v139 = vshrl.u32 %v138, 7
  %v140 = vsub.s32 0, %v139
  %v141 = vrot.slane %v136, %v140
  %vm143 = vcmask 31744
  %v145 = vsel %vm143, %v133, 0
  %v148 = vsel %vm143, %v134, 0
  %vm150 = vcmask 1043456
  %v152 = vsel %vm150, %v135, 0
  %154 = vmatprep.subr.mxu0 0.0
  %155 = vmatpush1.msra.mxu0 %v152
  %156 = vmatprep.subr.mxu0 0.0
  %157 = vmatpush1.msra.mxu0 0.0
  %158 = vmatprep.subr.mxu0 0.0
  %159 = vmatpush1.msra.mxu0 0.0
  %160 = vmatprep.subr.mxu0 0.0
  %161 = vmatpush1.msra.mxu0 0.0
  %162 = vmatprep.subr.mxu0 0.0
  %163 = vmatpush1.msra.mxu0 0.0
  %164 = vmatprep.subr.mxu0 0.0
  %165 = vmatpush1.msra.mxu0 0.0
  %166 = vmatprep.subr.mxu0 0.0
  %167 = vmatpush1.msra.mxu0 0.0
  %168 = vmatprep.subr.mxu0 0.0
  %169 = vmatpush1.msra.mxu0 0.0
  %170 = vmatprep.subr.mxu0 0.0
  %171 = vmatpush1.msra.mxu0 0.0
  %172 = vmatprep.subr.mxu0 0.0
  %173 = vmatpush1.msra.mxu0 0.0
  %174 = vmatprep.subr.mxu0 0.0
  %175 = vmatpush1.msra.mxu0 0.0
  %176 = vmatprep.subr.mxu0 0.0
  %177 = vmatpush1.msra.mxu0 0.0
  %178 = vmatprep.subr.mxu0 0.0
  %179 = vmatpush1.msra.mxu0 0.0
  %180 = vmatprep.subr.mxu0 0.0
  %181 = vmatpush1.msra.mxu0 0.0
  %182 = vmatprep.subr.mxu0 0.0
  %183 = vmatpush1.msra.mxu0 0.0
  %184 = vmatprep.subr.mxu0 0.0
  %185 = vmatpush1.msra.mxu0 0.0
  %186 = vmatprep.subr.mxu0 0.0
  %187 = vmatpush1.msra.mxu0 0.0
  %188 = vmatprep.subr.mxu0 0.0
  %189 = vmatpush1.msra.mxu0 0.0
  %190 = vmatprep.subr.mxu0 0.0
  %191 = vmatpush1.msra.mxu0 0.0
  %192 = vmatprep.subr.mxu0 0.0
  %193 = vmatpush1.msra.mxu0 0.0
  %194 = vmatprep.subr.mxu0 0.0
  %195 = vmatpush1.msra.mxu0 0.0
  %196 = vmatprep.subr.mxu0 0.0
  %197 = vmatpush1.msra.mxu0 0.0
  %198 = vmatprep.subr.mxu0 0.0
  %199 = vmatpush1.msra.mxu0 0.0
  %200 = vmatprep.subr.mxu0 0.0
  %201 = vmatpush1.msra.mxu0 0.0
  %202 = vmatprep.subr.mxu0 0.0
  %203 = vmatpush1.msra.mxu0 0.0
  %204 = vmatprep.subr.mxu0 0.0
  %205 = vmatpush1.msra.mxu0 0.0
  %206 = vmatprep.subr.mxu0 0.0
  %207 = vmatpush1.msra.mxu0 0.0
  %208 = vmatprep.subr.mxu0 0.0
  %209 = vmatpush1.msra.mxu0 0.0
  %210 = vmatprep.subr.mxu0 0.0
  %211 = vmatpush1.msra.mxu0 0.0
  %212 = vmatprep.subr.mxu0 0.0
  %213 = vmatpush1.msra.mxu0 0.0
  %214 = vmatprep.subr.mxu0 0.0
  %215 = vmatpush1.msra.mxu0 0.0
  %216 = vmatprep.subr.mxu0 0.0
  %217 = vmatpush1.msra.mxu0 0.0
  %218 = vmatprep.mubr.f32.mxu0 0.0
  %219 = vmatmul.mubr.f32.gmra.mrb[0].mxu0 %v145
  %v220 = vpop.f32.mrb[0].mxu0
  %v221 = vadd.f32 %v141, %v220
  %v222 = vpop.f32.mrb[0].mxu0
  %223 = vmatprep.mubr.f32.mxu0 0.0
  %224 = vmatmul.mubr.f32.gmra.mrb[0].mxu0 %v148
  %v225 = vpop.f32.mrb[0].mxu0
  %v226 = vadd.f32 %v141, %v225
  %v227 = vpop.f32.mrb[0].mxu0
  %228 = vdwg.mxu0
  %v229 = vmax.f32 %v221, 0.0
  %v230 = vmax.f32 %v226, 0.0
  %v231 = vld [vmem:[%s6] sm:$0xff]
  %v232 = vld [vmem:[%s6 + $0x8] sm:$0xff]
  %v233 = vld [vmem:[%s7] sm:$0xff]
  %vm234 = vcmask 64512
  %v236 = vsel %vm234, %v229, 0
  %v239 = vsel %vm234, %v230, 0
  %241 = vmatprep.subr.mxu0 0.0
  %242 = vmatpush1.msra.mxu0 %v233
  %243 = vmatprep.subr.mxu0 0.0
  %244 = vmatpush1.msra.mxu0 0.0
  %245 = vmatprep.subr.mxu0 0.0
  %246 = vmatpush1.msra.mxu0 0.0
  %247 = vmatprep.subr.mxu0 0.0
  %248 = vmatpush1.msra.mxu0 0.0
  %249 = vmatprep.subr.mxu0 0.0
  %250 = vmatpush1.msra.mxu0 0.0
  %251 = vmatprep.subr.mxu0 0.0
  %252 = vmatpush1.msra.mxu0 0.0
  %253 = vmatprep.subr.mxu0 0.0
  %254 = vmatpush1.msra.mxu0 0.0
  %255 = vmatprep.subr.mxu0 0.0
  %256 = vmatpush1.msra.mxu0 0.0
  %257 = vmatprep.subr.mxu0 0.0
  %258 = vmatpush1.msra.mxu0 0.0
  %259 = vmatprep.subr.mxu0 0.0
  %260 = vmatpush1.msra.mxu0 0.0
  %261 = vmatprep.subr.mxu0 0.0
  %262 = vmatpush1.msra.mxu0 0.0
  %263 = vmatprep.subr.mxu0 0.0
  %264 = vmatpush1.msra.mxu0 0.0
  %265 = vmatprep.subr.mxu0 0.0
  %266 = vmatpush1.msra.mxu0 0.0
  %267 = vmatprep.subr.mxu0 0.0
  %268 = vmatpush1.msra.mxu0 0.0
  %269 = vmatprep.subr.mxu0 0.0
  %270 = vmatpush1.msra.mxu0 0.0
  %271 = vmatprep.subr.mxu0 0.0
  %272 = vmatpush1.msra.mxu0 0.0
  %273 = vmatprep.subr.mxu0 0.0
  %274 = vmatpush1.msra.mxu0 0.0
  %275 = vmatprep.subr.mxu0 0.0
  %276 = vmatpush1.msra.mxu0 0.0
  %277 = vmatprep.subr.mxu0 0.0
  %278 = vmatpush1.msra.mxu0 0.0
  %279 = vmatprep.subr.mxu0 0.0
  %280 = vmatpush1.msra.mxu0 0.0
  %281 = vmatprep.subr.mxu0 0.0
  %282 = vmatpush1.msra.mxu0 0.0
  %283 = vmatprep.subr.mxu0 0.0
  %284 = vmatpush1.msra.mxu0 0.0
  %285 = vmatprep.subr.mxu0 0.0
  %286 = vmatpush1.msra.mxu0 0.0
  %287 = vmatprep.subr.mxu0 0.0
  %288 = vmatpush1.msra.mxu0 0.0
  %289 = vmatprep.subr.mxu0 0.0
  %290 = vmatpush1.msra.mxu0 0.0
  %291 = vmatprep.subr.mxu0 0.0
  %292 = vmatpush1.msra.mxu0 0.0
  %293 = vmatprep.subr.mxu0 0.0
  %294 = vmatpush1.msra.mxu0 0.0
  %295 = vmatprep.subr.mxu0 0.0
  %296 = vmatpush1.msra.mxu0 0.0
  %297 = vmatprep.subr.mxu0 0.0
  %298 = vmatpush1.msra.mxu0 0.0
  %299 = vmatprep.subr.mxu0 0.0
  %300 = vmatpush1.msra.mxu0 0.0
  %301 = vmatprep.subr.mxu0 0.0
  %302 = vmatpush1.msra.mxu0 0.0
  %303 = vmatprep.subr.mxu0 0.0
  %304 = vmatpush1.msra.mxu0 0.0
  %305 = vmatprep.mubr.f32.mxu0 0.0
  %306 = vmatmul.mubr.f32.gmra.mrb[0].mxu0 %v236
  %v307 = vpop.f32.mrb[0].mxu0
  %v308 = vadd.f32 0.0, %v307
  %v309 = vpop.f32.mrb[0].mxu0
  %310 = vmatprep.mubr.f32.mxu0 0.0
  %311 = vmatmul.mubr.f32.gmra.mrb[0].mxu0 %v239
  %v312 = vpop.f32.mrb[0].mxu0
  %v313 = vadd.f32 0.0, %v312
  %v314 = vpop.f32.mrb[0].mxu0
  %315 = vdwg.mxu0
  %v317 = vsel %vm49, %v131, 0
  %v320 = vsel %vm49, %v132, 0
  %322 = vmatprep.subr.mxu0 0.0
  %323 = vmatpush1.msra.mxu0 %v231
  %324 = vmatprep.subr.mxu0 0.0
  %325 = vmatpush1.msra.mxu0 %v232
  %326 = vmatprep.subr.mxu0 0.0
  %327 = vmatpush1.msra.mxu0 0.0
  %328 = vmatprep.subr.mxu0 0.0
  %329 = vmatpush1.msra.mxu0 0.0
  %330 = vmatprep.subr.mxu0 0.0
  %331 = vmatpush1.msra.mxu0 0.0
  %332 = vmatprep.subr.mxu0 0.0
  %333 = vmatpush1.msra.mxu0 0.0
  %334 = vmatprep.subr.mxu0 0.0
  %335 = vmatpush1.msra.mxu0 0.0
  %336 = vmatprep.subr.mxu0 0.0
  %337 = vmatpush1.msra.mxu0 0.0
  %338 = vmatprep.subr.mxu0 0.0
  %339 = vmatpush1.msra.mxu0 0.0
  %340 = vmatprep.subr.mxu0 0.0
  %341 = vmatpush1.msra.mxu0 0.0
  %342 = vmatprep.subr.mxu0 0.0
  %343 = vmatpush1.msra.mxu0 0.0
  %344 = vmatprep.subr.mxu0 0.0
  %345 = vmatpush1.msra.mxu0 0.0
  %346 = vmatprep.subr.mxu0 0.0
  %347 = vmatpush1.msra.mxu0 0.0
  %348 = vmatprep.subr.mxu0 0.0
  %349 = vmatpush1.msra.mxu0 0.0
  %350 = vmatprep.subr.mxu0 0.0
  %351 = vmatpush1.msra.mxu0 0.0
  %352 = vmatprep.subr.mxu0 0.0
  %353 = vmatpush1.msra.mxu0 0.0
  %354 = vmatprep.subr.mxu0 0.0
  %355 = vmatpush1.msra.mxu0 0.0
  %356 = vmatprep.subr.mxu0 0.0
  %357 = vmatpush1.msra.mxu0 0.0
  %358 = vmatprep.subr.mxu0 0.0
  %359 = vmatpush1.msra.mxu0 0.0
  %360 = vmatprep.subr.mxu0 0.0
  %361 = vmatpush1.msra.mxu0 0.0
  %362 = vmatprep.subr.mxu0 0.0
  %363 = vmatpush1.msra.mxu0 0.0
  %364 = vmatprep.subr.mxu0 0.0
  %365 = vmatpush1.msra.mxu0 0.0
  %366 = vmatprep.subr.mxu0 0.0
  %367 = vmatpush1.msra.mxu0 0.0
  %368 = vmatprep.subr.mxu0 0.0
  %369 = vmatpush1.msra.mxu0 0.0
  %370 = vmatprep.subr.mxu0 0.0
  %371 = vmatpush1.msra.mxu0 0.0
  %372 = vmatprep.subr.mxu0 0.0
  %373 = vmatpush1.msra.mxu0 0.0
  %374 = vmatprep.subr.mxu0 0.0
  %375 = vmatpush1.msra.mxu0 0.0
  %376 = vmatprep.subr.mxu0 0.0
  %377 = vmatpush1.msra.mxu0 0.0
  %378 = vmatprep.subr.mxu0 0.0
  %379 = vmatpush1.msra.mxu0 0.0
  %380 = vmatprep.subr.mxu0 0.0
  %381 = vmatpush1.msra.mxu0 0.0
  %382 = vmatprep.subr.mxu0 0.0
  %383 = vmatpush1.msra.mxu0 0.0
  %384 = vmatprep.subr.mxu0 0.0
  %385 = vmatpush1.msra.mxu0 0.0
  %386 = vmatprep.mubr.f32.mxu0 0.0
  %387 = vmatmul.mubr.f32.gmra.mrb[0].mxu0 %v317
  %v388 = vpop.f32.mrb[0].mxu0
  %v389 = vadd.f32 %v308, %v388
  %v390 = vpop.f32.mrb[0].mxu0
  %391 = vmatprep.mubr.f32.mxu0 0.0
  %392 = vmatmul.mubr.f32.gmra.mrb[0].mxu0 %v320
  %v393 = vpop.f32.mrb[0].mxu0
  %v394 = vadd.f32 %v313, %v393
  %v395 = vpop.f32.mrb[0].mxu0
  %396 = vdwg.mxu0
  %v397 = vld [vmem:[%s8] sm:$0x1]
  %v399 = vlaneseq
  %v400 = vshrl.u32 %v399, 7
  %v401 = vsub.s32 0, %v400
  %v402 = vrot.slane %v397, %v401
  %v404 = vadd.f32 %v389, %v402
  %v405 = vadd.f32 %v394, %v402
  %v406 = vmax.f32 %v404, 0.0
  %v407 = vmax.f32 %v405, 0.0
  %v408 = vld [vmem:[%s9] sm:$0xff]
  %v409 = vld [vmem:[%s9 + $0x8] sm:$0xff]
  %v410 = vld [vmem:[%s10] sm:$0x1]
  %v412 = vlaneseq
  %v413 = vshrl.u32 %v412, 7
  %v414 = vsub.s32 0, %v413
  %v415 = vrot.slane %v410, %v414
  %v418 = vsel %vm49, %v406, 0
  %v421 = vsel %vm49, %v407, 0
  %423 = vmatprep.subr.mxu0 0.0
  %424 = vmatpush1.msra.mxu0 %v408
  %425 = vmatprep.subr.mxu0 0.0
  %426 = vmatpush1.msra.mxu0 %v409
  %427 = vmatprep.subr.mxu0 0.0
  %428 = vmatpush1.msra.mxu0 0.0
  %429 = vmatprep.subr.mxu0 0.0
  %430 = vmatpush1.msra.mxu0 0.0
  %431 = vmatprep.subr.mxu0 0.0
  %432 = vmatpush1.msra.mxu0 0.0
  %433 = vmatprep.subr.mxu0 0.0
  %434 = vmatpush1.msra.mxu0 0.0
  %435 = vmatprep.subr.mxu0 0.0
  %436 = vmatpush1.msra.mxu0 0.0
  %437 = vmatprep.subr.mxu0 0.0
  %438 = vmatpush1.msra.mxu0 0.0
  %439 = vmatprep.subr.mxu0 0.0
  %440 = vmatpush1.msra.mxu0 0.0
  %441 = vmatprep.subr.mxu0 0.0
  %442 = vmatpush1.msra.mxu0 0.0
  %443 = vmatprep.subr.mxu0 0.0
  %444 = vmatpush1.msra.mxu0 0.0
  %445 = vmatprep.subr.mxu0 0.0
  %446 = vmatpush1.msra.mxu0 0.0
  %447 = vmatprep.subr.mxu0 0.0
  %448 = vmatpush1.msra.mxu0 0.0
  %449 = vmatprep.subr.mxu0 0.0
  %450 = vmatpush1.msra.mxu0 0.0
  %451 = vmatprep.subr.mxu0 0.0
  %452 = vmatpush1.msra.mxu0 0.0
  %453 = vmatprep.subr.mxu0 0.0
  %454 = vmatpush1.msra.mxu0 0.0
  %455 = vmatprep.subr.mxu0 0.0
  %456 = vmatpush1.msra.mxu0 0.0
  %457 = vmatprep.subr.mxu0 0.0
  %458 = vmatpush1.msra.mxu0 0.0
  %459 = vmatprep.subr.mxu0 0.0
  %460 = vmatpush1.msra.mxu0 0.0
  %461 = vmatprep.subr.mxu0 0.0
  %462 = vmatpush1.msra.mxu0 0.0
  %463 = vmatprep.subr.mxu0 0.0
  %464 = vmatpush1.msra.mxu0 0.0
  %465 = vmatprep.subr.mxu0 0.0
  %466 = vmatpush1.msra.mxu0 0.0
  %467 = vmatprep.subr.mxu0 0.0
  %468 = vmatpush1.msra.mxu0 0.0
  %469 = vmatprep.subr.mxu0 0.0
  %470 = vmatpush1.msra.mxu0 0.0
  %471 = vmatprep.subr.mxu0 0.0
  %472 = vmatpush1.msra.mxu0 0.0
  %473 = vmatprep.subr.mxu0 0.0
  %474 = vmatpush1.msra.mxu0 0.0
  %475 = vmatprep.subr.mxu0 0.0
  %476 = vmatpush1.msra.mxu0 0.0
  %477 = vmatprep.subr.mxu0 0.0
  %478 = vmatpush1.msra.mxu0 0.0
  %479 = vmatprep.subr.mxu0 0.0
  %480 = vmatpush1.msra.mxu0 0.0
  %481 = vmatprep.subr.mxu0 0.0
  %482 = vmatpush1.msra.mxu0 0.0
  %483 = vmatprep.subr.mxu0 0.0
  %484 = vmatpush1.msra.mxu0 0.0
  %485 = vmatprep.subr.mxu0 0.0
  %486 = vmatpush1.msra.mxu0 0.0
  %487 = vmatprep.mubr.f32.mxu0 0.0
  %488 = vmatmul.mubr.f32.gmra.mrb[0].mxu0 %v418
  %v489 = vpop.f32.mrb[0].mxu0
  %v490 = vadd.f32 %v415, %v489
  %v491 = vpop.f32.mrb[0].mxu0
  %492 = vmatprep.mubr.f32.mxu0 0.0
  %493 = vmatmul.mubr.f32.gmra.mrb[0].mxu0 %v421
  %v494 = vpop.f32.mrb[0].mxu0
  %v495 = vadd.f32 %v415, %v494
  %v496 = vpop.f32.mrb[0].mxu0
  %497 = vdwg.mxu0
  %v498 = vmax.f32 %v490, 0.0
  %v499 = vmax.f32 %v495, 0.0
  %500 = vst.msk [vmem:[%s11] sm:$0xff] %vm234, %v498
  %501 = vst.msk [vmem:[%s11 + $0x8] sm:$0xff] %vm234, %v499
  // Predicated region
  $region46: #{_lambda_.5} parent=0 // pred_check
    _
  $region47: #{_lambda_.5} parent=0 // pred_check_branch
    %503 = sbr.rel (0) target = $region49
  $region48: #{_lambda_.5} parent=0 // pred_region
    _
  $region49: #{_lambda_.5} parent=0 // pred_fallthru
    _
  // Predicated region
  $region50: #{_lambda_.5} parent=0 // pred_check
    _
  $region51: #{_lambda_.5} parent=0 // pred_check_branch
    %505 = sbr.rel (0) target = $region53
  $region52: #{_lambda_.5} parent=0 // pred_region
    _
  $region53: #{_lambda_.5} parent=0 // pred_fallthru
    _

// kernel: _lambda_.7
$region0: #{_lambda_.7}
  #allocation0 [shape = 'u32[]', space=smem, size = 0x4, offset = 0x4, fixed_abs, tag = 'smem constant byte address 0x4 - core index']
  #allocation1 [shape = 'u32[144,128]{1,0:T(1,128)}', space=vmem, size = 0x12000, scoped, tag = 'internal scratch']
  %s0 = inlined_call_operand.vmem [shape: f32[8,16], index: 0, kind: input, shape index: {}]
  %s1 = inlined_call_operand.vmem [shape: f32[8,4], index: 1, kind: input, shape index: {}]
  %s2 = inlined_call_operand.vmem [shape: f32[16,16], index: 2, kind: input, shape index: {}]
  %s3 = inlined_call_operand.vmem [shape: f32[1,16], index: 3, kind: input, shape index: {}]
  %s4 = inlined_call_operand.vmem [shape: f32[4,8], index: 4, kind: input, shape index: {}]
  %s5 = inlined_call_operand.vmem [shape: f32[1,8], index: 5, kind: input, shape index: {}]
  %s6 = inlined_call_operand.vmem [shape: f32[16,16], index: 6, kind: input, shape index: {}]
  %s7 = inlined_call_operand.vmem [shape: f32[8,16], index: 7, kind: input, shape index: {}]
  %s8 = inlined_call_operand.vmem [shape: f32[1,16], index: 8, kind: input, shape index: {}]
  %s9 = inlined_call_operand.vmem [shape: f32[16,8], index: 9, kind: input, shape index: {}]
  %s10 = inlined_call_operand.vmem [shape: f32[1,8], index: 10, kind: input, shape index: {}]
  %s11 = inlined_call_operand.vmem [shape: f32[16,8], index: 11, kind: input, shape index: {}]
  %s12 = inlined_call_operand.hbm [shape: f32[8,16], index: 12, kind: output, shape index: {}]
  %s13 = sld [smem:[#allocation0]]
  $region58: #{_lambda_.7} parent=0
    _
  %s15 = ssub.s32 1, %s13
  %s16 = scalar_select 0, %s15, %s13
  $region1: #{_lambda_.7} parent=0
    #allocation2 [shape = 'u8[4096]{0}', space=vmem, size = 0x1000, scoped, tag = 'output window, operand 0, single buffered']
    #allocation3 [shape = 's32[1]{0}', space=sflag, size = 0x4, scoped, tag = 'scoped memory for _lambda_.7']
    %17 = vsyncpa [#allocation3], 0
    // Predicated region
    $region2: #{_lambda_.7} parent=1 // pred_check
      _
    $region3: #{_lambda_.7} parent=1 // pred_check_branch
      %19 = sbr.rel (0) target = $region5
    $region4: #{_lambda_.7} parent=1 // pred_region
      _
    $region5: #{_lambda_.7} parent=1 // pred_fallthru
      _
    // Predicated region
    $region6: #{_lambda_.7} parent=1 // pred_check
      _
    $region7: #{_lambda_.7} parent=1 // pred_check_branch
      %21 = sbr.rel (0) target = $region9
    $region8: #{_lambda_.7} parent=1 // pred_region
      _
    $region9: #{_lambda_.7} parent=1 // pred_fallthru
      _
    // Predicated region
    $region10: #{_lambda_.7} parent=1 // pred_check
      _
    $region11: #{_lambda_.7} parent=1 // pred_check_branch
      %23 = sbr.rel (0) target = $region13
    $region12: #{_lambda_.7} parent=1 // pred_region
      _
    $region13: #{_lambda_.7} parent=1 // pred_fallthru
      _
    // Predicated region
    $region14: #{_lambda_.7} parent=1 // pred_check
      _
    $region15: #{_lambda_.7} parent=1 // pred_check_branch
      %25 = sbr.rel (0) target = $region17
    $region16: #{_lambda_.7} parent=1 // pred_region
      _
    $region17: #{_lambda_.7} parent=1 // pred_fallthru
      _
    // Predicated region
    $region18: #{_lambda_.7} parent=1 // pred_check
      _
    $region19: #{_lambda_.7} parent=1 // pred_check_branch
      %27 = sbr.rel (0) target = $region21
    $region20: #{_lambda_.7} parent=1 // pred_region
      _
    $region21: #{_lambda_.7} parent=1 // pred_fallthru
      _
    // Predicated region
    $region22: #{_lambda_.7} parent=1 // pred_check
      _
    $region23: #{_lambda_.7} parent=1 // pred_check_branch
      %29 = sbr.rel (0) target = $region25
    $region24: #{_lambda_.7} parent=1 // pred_region
      _
    $region25: #{_lambda_.7} parent=1 // pred_fallthru
      _
    // Predicated region
    $region26: #{_lambda_.7} parent=1 // pred_check
      _
    $region27: #{_lambda_.7} parent=1 // pred_check_branch
      %31 = sbr.rel (0) target = $region29
    $region28: #{_lambda_.7} parent=1 // pred_region
      _
    $region29: #{_lambda_.7} parent=1 // pred_fallthru
      _
    // Predicated region
    $region30: #{_lambda_.7} parent=1 // pred_check
      _
    $region31: #{_lambda_.7} parent=1 // pred_check_branch
      %33 = sbr.rel (0) target = $region33
    $region32: #{_lambda_.7} parent=1 // pred_region
      _
    $region33: #{_lambda_.7} parent=1 // pred_fallthru
      _
    // Predicated region
    $region34: #{_lambda_.7} parent=1 // pred_check
      _
    $region35: #{_lambda_.7} parent=1 // pred_check_branch
      %35 = sbr.rel (0) target = $region37
    $region36: #{_lambda_.7} parent=1 // pred_region
      _
    $region37: #{_lambda_.7} parent=1 // pred_fallthru
      _
    // Predicated region
    $region38: #{_lambda_.7} parent=1 // pred_check
      _
    $region39: #{_lambda_.7} parent=1 // pred_check_branch
      %37 = sbr.rel (0) target = $region41
    $region40: #{_lambda_.7} parent=1 // pred_region
      _
    $region41: #{_lambda_.7} parent=1 // pred_fallthru
      _
    // Predicated region
    $region42: #{_lambda_.7} parent=1 // pred_check
      _
    $region43: #{_lambda_.7} parent=1 // pred_check_branch
      %39 = sbr.rel (0) target = $region45
    $region44: #{_lambda_.7} parent=1 // pred_region
      _
    $region45: #{_lambda_.7} parent=1 // pred_fallthru
      _
    // Predicated region
    $region46: #{_lambda_.7} parent=1 // pred_check
      _
    $region47: #{_lambda_.7} parent=1 // pred_check_branch
      %41 = sbr.rel (0) target = $region49
    $region48: #{_lambda_.7} parent=1 // pred_region
      _
    $region49: #{_lambda_.7} parent=1 // pred_fallthru
      _
    %v42 = vld [vmem:[%s0] sm:$0xff]
    %v43 = vld [vmem:[%s2] sm:$0xff]
    %v44 = vld [vmem:[%s2 + $0x8] sm:$0xff]
    %v45 = vld [vmem:[%s3] sm:$0x1]
    %v47 = vlaneseq
    %v48 = vshrl.u32 %v47, 7
    %v49 = vsub.s32 0, %v48
    %v50 = vrot.slane %v45, %v49
    %vm52 = vcmask 130048
    %v54 = vsel %vm52, %v42, 0
    %56 = vmatprep.subr.mxu0 0.0
    %57 = vmatpush1.msra.mxu0 %v43
    %58 = vmatprep.subr.mxu0 0.0
    %59 = vmatpush1.msra.mxu0 %v44
    %60 = vmatprep.subr.mxu0 0.0
    %61 = vmatpush1.msra.mxu0 0.0
    %62 = vmatprep.subr.mxu0 0.0
    %63 = vmatpush1.msra.mxu0 0.0
    %64 = vmatprep.subr.mxu0 0.0
    %65 = vmatpush1.msra.mxu0 0.0
    %66 = vmatprep.subr.mxu0 0.0
    %67 = vmatpush1.msra.mxu0 0.0
    %68 = vmatprep.subr.mxu0 0.0
    %69 = vmatpush1.msra.mxu0 0.0
    %70 = vmatprep.subr.mxu0 0.0
    %71 = vmatpush1.msra.mxu0 0.0
    %72 = vmatprep.subr.mxu0 0.0
    %73 = vmatpush1.msra.mxu0 0.0
    %74 = vmatprep.subr.mxu0 0.0
    %75 = vmatpush1.msra.mxu0 0.0
    %76 = vmatprep.subr.mxu0 0.0
    %77 = vmatpush1.msra.mxu0 0.0
    %78 = vmatprep.subr.mxu0 0.0
    %79 = vmatpush1.msra.mxu0 0.0
    %80 = vmatprep.subr.mxu0 0.0
    %81 = vmatpush1.msra.mxu0 0.0
    %82 = vmatprep.subr.mxu0 0.0
    %83 = vmatpush1.msra.mxu0 0.0
    %84 = vmatprep.subr.mxu0 0.0
    %85 = vmatpush1.msra.mxu0 0.0
    %86 = vmatprep.subr.mxu0 0.0
    %87 = vmatpush1.msra.mxu0 0.0
    %88 = vmatprep.subr.mxu0 0.0
    %89 = vmatpush1.msra.mxu0 0.0
    %90 = vmatprep.subr.mxu0 0.0
    %91 = vmatpush1.msra.mxu0 0.0
    %92 = vmatprep.subr.mxu0 0.0
    %93 = vmatpush1.msra.mxu0 0.0
    %94 = vmatprep.subr.mxu0 0.0
    %95 = vmatpush1.msra.mxu0 0.0
    %96 = vmatprep.subr.mxu0 0.0
    %97 = vmatpush1.msra.mxu0 0.0
    %98 = vmatprep.subr.mxu0 0.0
    %99 = vmatpush1.msra.mxu0 0.0
    %100 = vmatprep.subr.mxu0 0.0
    %101 = vmatpush1.msra.mxu0 0.0
    %102 = vmatprep.subr.mxu0 0.0
    %103 = vmatpush1.msra.mxu0 0.0
    %104 = vmatprep.subr.mxu0 0.0
    %105 = vmatpush1.msra.mxu0 0.0
    %106 = vmatprep.subr.mxu0 0.0
    %107 = vmatpush1.msra.mxu0 0.0
    %108 = vmatprep.subr.mxu0 0.0
    %109 = vmatpush1.msra.mxu0 0.0
    %110 = vmatprep.subr.mxu0 0.0
    %111 = vmatpush1.msra.mxu0 0.0
    %112 = vmatprep.subr.mxu0 0.0
    %113 = vmatpush1.msra.mxu0 0.0
    %114 = vmatprep.subr.mxu0 0.0
    %115 = vmatpush1.msra.mxu0 0.0
    %116 = vmatprep.subr.mxu0 0.0
    %117 = vmatpush1.msra.mxu0 0.0
    %118 = vmatprep.subr.mxu0 0.0
    %119 = vmatpush1.msra.mxu0 0.0
    %120 = vmatprep.mubr.f32.mxu0 0.0
    %121 = vmatmul.mubr.f32.gmra.mrb[0].mxu0 %v54
    %v122 = vpop.f32.mrb[0].mxu0
    %v123 = vadd.f32 %v50, %v122
    %v124 = vpop.f32.mrb[0].mxu0
    %125 = vdwg.mxu0
    %v126 = vmax.f32 %v123, 0.0
    %v127 = vld [vmem:[%s1] sm:$0xff]
    %v128 = vld [vmem:[%s4] sm:$0xf]
    %v129 = vld [vmem:[%s5] sm:$0x1]
    %v131 = vlaneseq
    %v132 = vshrl.u32 %v131, 7
    %v133 = vsub.s32 0, %v132
    %v134 = vrot.slane %v129, %v133
    %vm136 = vcmask 31744
    %v138 = vsel %vm136, %v127, 0
    %vm140 = vcmask 1043456
    %v142 = vsel %vm140, %v128, 0
    %144 = vmatprep.subr.mxu0 0.0
    %145 = vmatpush1.msra.mxu0 %v142
    %146 = vmatprep.subr.mxu0 0.0
    %147 = vmatpush1.msra.mxu0 0.0
    %148 = vmatprep.subr.mxu0 0.0
    %149 = vmatpush1.msra.mxu0 0.0
    %150 = vmatprep.subr.mxu0 0.0
    %151 = vmatpush1.msra.mxu0 0.0
    %152 = vmatprep.subr.mxu0 0.0
    %153 = vmatpush1.msra.mxu0 0.0
    %154 = vmatprep.subr.mxu0 0.0
    %155 = vmatpush1.msra.mxu0 0.0
    %156 = vmatprep.subr.mxu0 0.0
    %157 = vmatpush1.msra.mxu0 0.0
    %158 = vmatprep.subr.mxu0 0.0
    %159 = vmatpush1.msra.mxu0 0.0
    %160 = vmatprep.subr.mxu0 0.0
    %161 = vmatpush1.msra.mxu0 0.0
    %162 = vmatprep.subr.mxu0 0.0
    %163 = vmatpush1.msra.mxu0 0.0
    %164 = vmatprep.subr.mxu0 0.0
    %165 = vmatpush1.msra.mxu0 0.0
    %166 = vmatprep.subr.mxu0 0.0
    %167 = vmatpush1.msra.mxu0 0.0
    %168 = vmatprep.subr.mxu0 0.0
    %169 = vmatpush1.msra.mxu0 0.0
    %170 = vmatprep.subr.mxu0 0.0
    %171 = vmatpush1.msra.mxu0 0.0
    %172 = vmatprep.subr.mxu0 0.0
    %173 = vmatpush1.msra.mxu0 0.0
    %174 = vmatprep.subr.mxu0 0.0
    %175 = vmatpush1.msra.mxu0 0.0
    %176 = vmatprep.subr.mxu0 0.0
    %177 = vmatpush1.msra.mxu0 0.0
    %178 = vmatprep.subr.mxu0 0.0
    %179 = vmatpush1.msra.mxu0 0.0
    %180 = vmatprep.subr.mxu0 0.0
    %181 = vmatpush1.msra.mxu0 0.0
    %182 = vmatprep.subr.mxu0 0.0
    %183 = vmatpush1.msra.mxu0 0.0
    %184 = vmatprep.subr.mxu0 0.0
    %185 = vmatpush1.msra.mxu0 0.0
    %186 = vmatprep.subr.mxu0 0.0
    %187 = vmatpush1.msra.mxu0 0.0
    %188 = vmatprep.subr.mxu0 0.0
    %189 = vmatpush1.msra.mxu0 0.0
    %190 = vmatprep.subr.mxu0 0.0
    %191 = vmatpush1.msra.mxu0 0.0
    %192 = vmatprep.subr.mxu0 0.0
    %193 = vmatpush1.msra.mxu0 0.0
    %194 = vmatprep.subr.mxu0 0.0
    %195 = vmatpush1.msra.mxu0 0.0
    %196 = vmatprep.subr.mxu0 0.0
    %197 = vmatpush1.msra.mxu0 0.0
    %198 = vmatprep.subr.mxu0 0.0
    %199 = vmatpush1.msra.mxu0 0.0
    %200 = vmatprep.subr.mxu0 0.0
    %201 = vmatpush1.msra.mxu0 0.0
    %202 = vmatprep.subr.mxu0 0.0
    %203 = vmatpush1.msra.mxu0 0.0
    %204 = vmatprep.subr.mxu0 0.0
    %205 = vmatpush1.msra.mxu0 0.0
    %206 = vmatprep.subr.mxu0 0.0
    %207 = vmatpush1.msra.mxu0 0.0
    %208 = vmatprep.mubr.f32.mxu0 0.0
    %209 = vmatmul.mubr.f32.gmra.mrb[0].mxu0 %v138
    %v210 = vpop.f32.mrb[0].mxu0
    %v211 = vadd.f32 %v134, %v210
    %v212 = vpop.f32.mrb[0].mxu0
    %213 = vdwg.mxu0
    %v214 = vmax.f32 %v211, 0.0
    %v215 = vld [vmem:[%s6] sm:$0xff]
    %v216 = vld [vmem:[%s6 + $0x8] sm:$0xff]
    %v217 = vld [vmem:[%s7] sm:$0xff]
    %vm218 = vcmask 64512
    %v220 = vsel %vm218, %v214, 0
    %222 = vmatprep.subr.mxu0 0.0
    %223 = vmatpush1.msra.mxu0 %v217
    %224 = vmatprep.subr.mxu0 0.0
    %225 = vmatpush1.msra.mxu0 0.0
    %226 = vmatprep.subr.mxu0 0.0
    %227 = vmatpush1.msra.mxu0 0.0
    %228 = vmatprep.subr.mxu0 0.0
    %229 = vmatpush1.msra.mxu0 0.0
    %230 = vmatprep.subr.mxu0 0.0
    %231 = vmatpush1.msra.mxu0 0.0
    %232 = vmatprep.subr.mxu0 0.0
    %233 = vmatpush1.msra.mxu0 0.0
    %234 = vmatprep.subr.mxu0 0.0
    %235 = vmatpush1.msra.mxu0 0.0
    %236 = vmatprep.subr.mxu0 0.0
    %237 = vmatpush1.msra.mxu0 0.0
    %238 = vmatprep.subr.mxu0 0.0
    %239 = vmatpush1.msra.mxu0 0.0
    %240 = vmatprep.subr.mxu0 0.0
    %241 = vmatpush1.msra.mxu0 0.0
    %242 = vmatprep.subr.mxu0 0.0
    %243 = vmatpush1.msra.mxu0 0.0
    %244 = vmatprep.subr.mxu0 0.0
    %245 = vmatpush1.msra.mxu0 0.0
    %246 = vmatprep.subr.mxu0 0.0
    %247 = vmatpush1.msra.mxu0 0.0
    %248 = vmatprep.subr.mxu0 0.0
    %249 = vmatpush1.msra.mxu0 0.0
    %250 = vmatprep.subr.mxu0 0.0
    %251 = vmatpush1.msra.mxu0 0.0
    %252 = vmatprep.subr.mxu0 0.0
    %253 = vmatpush1.msra.mxu0 0.0
    %254 = vmatprep.subr.mxu0 0.0
    %255 = vmatpush1.msra.mxu0 0.0
    %256 = vmatprep.subr.mxu0 0.0
    %257 = vmatpush1.msra.mxu0 0.0
    %258 = vmatprep.subr.mxu0 0.0
    %259 = vmatpush1.msra.mxu0 0.0
    %260 = vmatprep.subr.mxu0 0.0
    %261 = vmatpush1.msra.mxu0 0.0
    %262 = vmatprep.subr.mxu0 0.0
    %263 = vmatpush1.msra.mxu0 0.0
    %264 = vmatprep.subr.mxu0 0.0
    %265 = vmatpush1.msra.mxu0 0.0
    %266 = vmatprep.subr.mxu0 0.0
    %267 = vmatpush1.msra.mxu0 0.0
    %268 = vmatprep.subr.mxu0 0.0
    %269 = vmatpush1.msra.mxu0 0.0
    %270 = vmatprep.subr.mxu0 0.0
    %271 = vmatpush1.msra.mxu0 0.0
    %272 = vmatprep.subr.mxu0 0.0
    %273 = vmatpush1.msra.mxu0 0.0
    %274 = vmatprep.subr.mxu0 0.0
    %275 = vmatpush1.msra.mxu0 0.0
    %276 = vmatprep.subr.mxu0 0.0
    %277 = vmatpush1.msra.mxu0 0.0
    %278 = vmatprep.subr.mxu0 0.0
    %279 = vmatpush1.msra.mxu0 0.0
    %280 = vmatprep.subr.mxu0 0.0
    %281 = vmatpush1.msra.mxu0 0.0
    %282 = vmatprep.subr.mxu0 0.0
    %283 = vmatpush1.msra.mxu0 0.0
    %284 = vmatprep.subr.mxu0 0.0
    %285 = vmatpush1.msra.mxu0 0.0
    %286 = vmatprep.mubr.f32.mxu0 0.0
    %287 = vmatmul.mubr.f32.gmra.mrb[0].mxu0 %v220
    %v288 = vpop.f32.mrb[0].mxu0
    %v289 = vadd.f32 0.0, %v288
    %v290 = vpop.f32.mrb[0].mxu0
    %291 = vdwg.mxu0
    %v293 = vsel %vm52, %v126, 0
    %295 = vmatprep.subr.mxu0 0.0
    %296 = vmatpush1.msra.mxu0 %v215
    %297 = vmatprep.subr.mxu0 0.0
    %298 = vmatpush1.msra.mxu0 %v216
    %299 = vmatprep.subr.mxu0 0.0
    %300 = vmatpush1.msra.mxu0 0.0
    %301 = vmatprep.subr.mxu0 0.0
    %302 = vmatpush1.msra.mxu0 0.0
    %303 = vmatprep.subr.mxu0 0.0
    %304 = vmatpush1.msra.mxu0 0.0
    %305 = vmatprep.subr.mxu0 0.0
    %306 = vmatpush1.msra.mxu0 0.0
    %307 = vmatprep.subr.mxu0 0.0
    %308 = vmatpush1.msra.mxu0 0.0
    %309 = vmatprep.subr.mxu0 0.0
    %310 = vmatpush1.msra.mxu0 0.0
    %311 = vmatprep.subr.mxu0 0.0
    %312 = vmatpush1.msra.mxu0 0.0
    %313 = vmatprep.subr.mxu0 0.0
    %314 = vmatpush1.msra.mxu0 0.0
    %315 = vmatprep.subr.mxu0 0.0
    %316 = vmatpush1.msra.mxu0 0.0
    %317 = vmatprep.subr.mxu0 0.0
    %318 = vmatpush1.msra.mxu0 0.0
    %319 = vmatprep.subr.mxu0 0.0
    %320 = vmatpush1.msra.mxu0 0.0
    %321 = vmatprep.subr.mxu0 0.0
    %322 = vmatpush1.msra.mxu0 0.0
    %323 = vmatprep.subr.mxu0 0.0
    %324 = vmatpush1.msra.mxu0 0.0
    %325 = vmatprep.subr.mxu0 0.0
    %326 = vmatpush1.msra.mxu0 0.0
    %327 = vmatprep.subr.mxu0 0.0
    %328 = vmatpush1.msra.mxu0 0.0
    %329 = vmatprep.subr.mxu0 0.0
    %330 = vmatpush1.msra.mxu0 0.0
    %331 = vmatprep.subr.mxu0 0.0
    %332 = vmatpush1.msra.mxu0 0.0
    %333 = vmatprep.subr.mxu0 0.0
    %334 = vmatpush1.msra.mxu0 0.0
    %335 = vmatprep.subr.mxu0 0.0
    %336 = vmatpush1.msra.mxu0 0.0
    %337 = vmatprep.subr.mxu0 0.0
    %338 = vmatpush1.msra.mxu0 0.0
    %339 = vmatprep.subr.mxu0 0.0
    %340 = vmatpush1.msra.mxu0 0.0
    %341 = vmatprep.subr.mxu0 0.0
    %342 = vmatpush1.msra.mxu0 0.0
    %343 = vmatprep.subr.mxu0 0.0
    %344 = vmatpush1.msra.mxu0 0.0
    %345 = vmatprep.subr.mxu0 0.0
    %346 = vmatpush1.msra.mxu0 0.0
    %347 = vmatprep.subr.mxu0 0.0
    %348 = vmatpush1.msra.mxu0 0.0
    %349 = vmatprep.subr.mxu0 0.0
    %350 = vmatpush1.msra.mxu0 0.0
    %351 = vmatprep.subr.mxu0 0.0
    %352 = vmatpush1.msra.mxu0 0.0
    %353 = vmatprep.subr.mxu0 0.0
    %354 = vmatpush1.msra.mxu0 0.0
    %355 = vmatprep.subr.mxu0 0.0
    %356 = vmatpush1.msra.mxu0 0.0
    %357 = vmatprep.subr.mxu0 0.0
    %358 = vmatpush1.msra.mxu0 0.0
    %359 = vmatprep.mubr.f32.mxu0 0.0
    %360 = vmatmul.mubr.f32.gmra.mrb[0].mxu0 %v293
    %v361 = vpop.f32.mrb[0].mxu0
    %v362 = vadd.f32 %v289, %v361
    %v363 = vpop.f32.mrb[0].mxu0
    %364 = vdwg.mxu0
    %v365 = vld [vmem:[%s8] sm:$0x1]
    %v367 = vlaneseq
    %v368 = vshrl.u32 %v367, 7
    %v369 = vsub.s32 0, %v368
    %v370 = vrot.slane %v365, %v369
    %v372 = vadd.f32 %v362, %v370
    %v373 = vmax.f32 %v372, 0.0
    %v374 = vld [vmem:[%s9] sm:$0xff]
    %v375 = vld [vmem:[%s9 + $0x8] sm:$0xff]
    %v376 = vld [vmem:[%s10] sm:$0x1]
    %v378 = vlaneseq
    %v379 = vshrl.u32 %v378, 7
    %v380 = vsub.s32 0, %v379
    %v381 = vrot.slane %v376, %v380
    %v384 = vsel %vm52, %v373, 0
    %386 = vmatprep.subr.mxu0 0.0
    %387 = vmatpush1.msra.mxu0 %v374
    %388 = vmatprep.subr.mxu0 0.0
    %389 = vmatpush1.msra.mxu0 %v375
    %390 = vmatprep.subr.mxu0 0.0
    %391 = vmatpush1.msra.mxu0 0.0
    %392 = vmatprep.subr.mxu0 0.0
    %393 = vmatpush1.msra.mxu0 0.0
    %394 = vmatprep.subr.mxu0 0.0
    %395 = vmatpush1.msra.mxu0 0.0
    %396 = vmatprep.subr.mxu0 0.0
    %397 = vmatpush1.msra.mxu0 0.0
    %398 = vmatprep.subr.mxu0 0.0
    %399 = vmatpush1.msra.mxu0 0.0
    %400 = vmatprep.subr.mxu0 0.0
    %401 = vmatpush1.msra.mxu0 0.0
    %402 = vmatprep.subr.mxu0 0.0
    %403 = vmatpush1.msra.mxu0 0.0
    %404 = vmatprep.subr.mxu0 0.0
    %405 = vmatpush1.msra.mxu0 0.0
    %406 = vmatprep.subr.mxu0 0.0
    %407 = vmatpush1.msra.mxu0 0.0
    %408 = vmatprep.subr.mxu0 0.0
    %409 = vmatpush1.msra.mxu0 0.0
    %410 = vmatprep.subr.mxu0 0.0
    %411 = vmatpush1.msra.mxu0 0.0
    %412 = vmatprep.subr.mxu0 0.0
    %413 = vmatpush1.msra.mxu0 0.0
    %414 = vmatprep.subr.mxu0 0.0
    %415 = vmatpush1.msra.mxu0 0.0
    %416 = vmatprep.subr.mxu0 0.0
    %417 = vmatpush1.msra.mxu0 0.0
    %418 = vmatprep.subr.mxu0 0.0
    %419 = vmatpush1.msra.mxu0 0.0
    %420 = vmatprep.subr.mxu0 0.0
    %421 = vmatpush1.msra.mxu0 0.0
    %422 = vmatprep.subr.mxu0 0.0
    %423 = vmatpush1.msra.mxu0 0.0
    %424 = vmatprep.subr.mxu0 0.0
    %425 = vmatpush1.msra.mxu0 0.0
    %426 = vmatprep.subr.mxu0 0.0
    %427 = vmatpush1.msra.mxu0 0.0
    %428 = vmatprep.subr.mxu0 0.0
    %429 = vmatpush1.msra.mxu0 0.0
    %430 = vmatprep.subr.mxu0 0.0
    %431 = vmatpush1.msra.mxu0 0.0
    %432 = vmatprep.subr.mxu0 0.0
    %433 = vmatpush1.msra.mxu0 0.0
    %434 = vmatprep.subr.mxu0 0.0
    %435 = vmatpush1.msra.mxu0 0.0
    %436 = vmatprep.subr.mxu0 0.0
    %437 = vmatpush1.msra.mxu0 0.0
    %438 = vmatprep.subr.mxu0 0.0
    %439 = vmatpush1.msra.mxu0 0.0
    %440 = vmatprep.subr.mxu0 0.0
    %441 = vmatpush1.msra.mxu0 0.0
    %442 = vmatprep.subr.mxu0 0.0
    %443 = vmatpush1.msra.mxu0 0.0
    %444 = vmatprep.subr.mxu0 0.0
    %445 = vmatpush1.msra.mxu0 0.0
    %446 = vmatprep.subr.mxu0 0.0
    %447 = vmatpush1.msra.mxu0 0.0
    %448 = vmatprep.subr.mxu0 0.0
    %449 = vmatpush1.msra.mxu0 0.0
    %450 = vmatprep.mubr.f32.mxu0 0.0
    %451 = vmatmul.mubr.f32.gmra.mrb[0].mxu0 %v384
    %v452 = vpop.f32.mrb[0].mxu0
    %v453 = vadd.f32 %v381, %v452
    %v454 = vpop.f32.mrb[0].mxu0
    %455 = vdwg.mxu0
    %v456 = vmax.f32 %v453, 0.0
    %v457 = vld [vmem:[%s11] sm:$0xff]
    %v458 = vld [vmem:[%s11 + $0x8] sm:$0xff]
    %v460 = vsel %vm218, %v456, 0
    %v463 = vsel %vm218, %v457, 0
    %v466 = vsel %vm218, %v458, 0
    %468 = vmatprep.subr.mxu0 0.0
    %469 = vmatpush1.xpose.msra.mxu0 %v463
    %470 = vmatprep.subr.mxu0 0.0
    %471 = vmatpush1.xpose.msra.mxu0 %v466
    %472 = vmatprep.subr.mxu0 0.0
    %473 = vmatpush1.xpose.msra.mxu0 0.0
    %474 = vmatprep.subr.mxu0 0.0
    %475 = vmatpush1.xpose.msra.mxu0 0.0
    %476 = vmatprep.subr.mxu0 0.0
    %477 = vmatpush1.xpose.msra.mxu0 0.0
    %478 = vmatprep.subr.mxu0 0.0
    %479 = vmatpush1.xpose.msra.mxu0 0.0
    %480 = vmatprep.subr.mxu0 0.0
    %481 = vmatpush1.xpose.msra.mxu0 0.0
    %482 = vmatprep.subr.mxu0 0.0
    %483 = vmatpush1.xpose.msra.mxu0 0.0
    %484 = vmatprep.subr.mxu0 0.0
    %485 = vmatpush1.xpose.msra.mxu0 0.0
    %486 = vmatprep.subr.mxu0 0.0
    %487 = vmatpush1.xpose.msra.mxu0 0.0
    %488 = vmatprep.subr.mxu0 0.0
    %489 = vmatpush1.xpose.msra.mxu0 0.0
    %490 = vmatprep.subr.mxu0 0.0
    %491 = vmatpush1.xpose.msra.mxu0 0.0
    %492 = vmatprep.subr.mxu0 0.0
    %493 = vmatpush1.xpose.msra.mxu0 0.0
    %494 = vmatprep.subr.mxu0 0.0
    %495 = vmatpush1.xpose.msra.mxu0 0.0
    %496 = vmatprep.subr.mxu0 0.0
    %497 = vmatpush1.xpose.msra.mxu0 0.0
    %498 = vmatprep.subr.mxu0 0.0
    %499 = vmatpush1.xpose.msra.mxu0 0.0
    %500 = vmatprep.subr.mxu0 0.0
    %501 = vmatpush1.xpose.msra.mxu0 0.0
    %502 = vmatprep.subr.mxu0 0.0
    %503 = vmatpush1.xpose.msra.mxu0 0.0
    %504 = vmatprep.subr.mxu0 0.0
    %505 = vmatpush1.xpose.msra.mxu0 0.0
    %506 = vmatprep.subr.mxu0 0.0
    %507 = vmatpush1.xpose.msra.mxu0 0.0
    %508 = vmatprep.subr.mxu0 0.0
    %509 = vmatpush1.xpose.msra.mxu0 0.0
    %510 = vmatprep.subr.mxu0 0.0
    %511 = vmatpush1.xpose.msra.mxu0 0.0
    %512 = vmatprep.subr.mxu0 0.0
    %513 = vmatpush1.xpose.msra.mxu0 0.0
    %514 = vmatprep.subr.mxu0 0.0
    %515 = vmatpush1.xpose.msra.mxu0 0.0
    %516 = vmatprep.subr.mxu0 0.0
    %517 = vmatpush1.xpose.msra.mxu0 0.0
    %518 = vmatprep.subr.mxu0 0.0
    %519 = vmatpush1.xpose.msra.mxu0 0.0
    %520 = vmatprep.subr.mxu0 0.0
    %521 = vmatpush1.xpose.msra.mxu0 0.0
    %522 = vmatprep.subr.mxu0 0.0
    %523 = vmatpush1.xpose.msra.mxu0 0.0
    %524 = vmatprep.subr.mxu0 0.0
    %525 = vmatpush1.xpose.msra.mxu0 0.0
    %526 = vmatprep.subr.mxu0 0.0
    %527 = vmatpush1.xpose.msra.mxu0 0.0
    %528 = vmatprep.subr.mxu0 0.0
    %529 = vmatpush1.xpose.msra.mxu0 0.0
    %530 = vmatprep.subr.mxu0 0.0
    %531 = vmatpush1.xpose.msra.mxu0 0.0
    %532 = vmatprep.mubr.f32.mxu0 0.0
    %533 = vmatmul.mubr.f32.gmra.mrb[0].mxu0 %v460
    %v534 = vpop.f32.mrb[0].mxu0
    %v535 = vadd.f32 0.0, %v534
    %v536 = vpop.f32.mrb[0].mxu0
    %537 = vdwg.mxu0
    %538 = vst.msk [vmem:[#allocation2] sm:$0xff] %vm52, %v535
    // Predicated region
    $region50: #{_lambda_.7} parent=1 // pred_check
      _
    $region51: #{_lambda_.7} parent=1 // pred_check_branch
      %540 = sbr.rel (0) target = $region53
    $region52: #{_lambda_.7} parent=1 // pred_region
      %s542 = ssub.s32 128, 128
      %543 = vsyncadd [#allocation3], %s542
      %s545 = sshll.u32 [#allocation2], 4
      %s546 = int_to_ptr.vmem [resolvable:$true] %s545
      %548 = dma.vmem_to_hbm [thread:$0]  %s546, 128, %s12, [#allocation3]
    $region53: #{_lambda_.7} parent=1 // pred_fallthru
      _
    // Predicated region
    $region54: #{_lambda_.7} parent=1 // pred_check
      _
    $region55: #{_lambda_.7} parent=1 // pred_check_branch
      %550 = sbr.rel (0) target = $region57
    $region56: #{_lambda_.7} parent=1 // pred_region
      %551 = dma.done [#allocation3], 128
    $region57: #{_lambda_.7} parent=1 // pred_fallthru
      _
    %552 = vsyncpa [#allocation3], 1

</llo_original>
